<compile_context>
chip_gen: v6e
topology: v6e:2x2x1
jax: 0.10.0
libtpu: 0.0.40
codegen_flags: <defaults>
</compile_context>

<pallas_src>
import functools

import jax
import jax.numpy as jnp
from jax import lax
from jax.experimental import pallas as pl
from jax.experimental.pallas import tpu as pltpu

EPS = 1e-5  # PyTorch LayerNorm default eps


def ms_cam_f_kernel(x_ref, y_ref,
                    wl1k_ref, wl2k_ref, pool_ref, bcast_ref,
                    wg1_ref, wg2_ref, mg_ref, gcol_ref,
                    lcol_ref, lrow_ref, bl2_ref,
                    out_ref, *, bblk, c):
    f32 = jnp.float32
    dot_dt = wl1k_ref.dtype              # bf16 by default, f32 for the exact path

    x = x_ref[0].astype(f32)             # (R, L), R = Bblk*C, L = tT*F, lane dense
    y = y_ref[0].astype(f32)
    xp = x + y                            # x_ = x + y
    xd = xp.astype(dot_dt)                # single cast at the MXU boundary

    # ---- MXU work back-to-back: local 1x1 conv (F->F/r, block-diag over tT)
    #      and the AvgPool over F (1/F already folded into pool_ref) ----------
    l1 = jnp.dot(xd, wl1k_ref[...], preferred_element_type=f32)    # (R, Lr)
    g0 = jnp.dot(xd, pool_ref[...], preferred_element_type=f32)    # (R, tT)

    # ------------------------- global branch (tiny) --------------------------
    gc = gcol_ref[...]                    # (Bblk*Cr, 4) = [bg1 | gamma_g | beta_g | a_g]
    g1 = jnp.dot(wg1_ref[...], g0.astype(dot_dt), preferred_element_type=f32)
    g1 = g1 + gc[:, 0:1]                                            # + bg1
    # Grouped (per batch sub-block) LayerNorm over the C//r rows via an f32
    # block-averaging matmul: exact mean, no reshape/relayout, negligible MACs.
    mg = mg_ref[...]                      # (Bblk*Cr, Bblk*Cr), 1/Cr per block
    mu_g = jnp.dot(mg, g1, preferred_element_type=f32)
    var_g = jnp.dot(mg, (g1 - mu_g) ** 2, preferred_element_type=f32)
    g2 = (g1 - mu_g) * lax.rsqrt(var_g + EPS) * gc[:, 1:2] + gc[:, 2:3]
    g3 = jnp.where(g2 >= 0.0, g2, gc[:, 3:4] * g2)                  # PReLU(C//r)
    g4 = jnp.dot(wg2_ref[...], g3.astype(dot_dt), preferred_element_type=f32)
    g4 = g4 + lcol_ref[:, 2:3]            # + bg2 on the small (R, tT) tensor
    # Broadcast over F with a 0/1 matmul -> stays lane-dense, no reshape.
    g4b = jnp.dot(g4.astype(dot_dt), bcast_ref[...], preferred_element_type=f32)

    # --------------- local branch (lane-dense; LN over the C rows) -----------
    lr = lrow_ref[...]                    # (2, Lr) = [bl1 | a_l], tiled per t-slot
    lc = lcol_ref[...]                    # (R, 3)  = [gamma_l | beta_l | bg2]
    l1 = l1 + lr[0:1, :]                                            # + bl1
    if bblk == 1:
        mu_l = jnp.mean(l1, axis=0, keepdims=True)
        var_l = jnp.mean((l1 - mu_l) ** 2, axis=0, keepdims=True)
        nrm = (l1 - mu_l) * lax.rsqrt(var_l + EPS)
    else:
        # Per batch sub-block mean over the C rows.  C % 8 == 0 is enforced by
        # the tile chooser, so the (Bblk*C, Lr) <-> (Bblk, C, Lr) reshape is
        # sublane-tile aligned (no relayout).
        l1_3 = l1.reshape(bblk, c, l1.shape[-1])
        mu_l = jnp.mean(l1_3, axis=1, keepdims=True)
        var_l = jnp.mean((l1_3 - mu_l) ** 2, axis=1, keepdims=True)
        nrm = ((l1_3 - mu_l) * lax.rsqrt(var_l + EPS)).reshape(l1.shape)
    l2 = nrm * lc[:, 0:1] + lc[:, 1:2]                              # LN(C) affine
    l3 = jnp.where(l2 >= 0.0, l2, lr[1:2, :] * l2)                  # PReLU(F//r)
    l4 = jnp.dot(l3.astype(dot_dt), wl2k_ref[...], preferred_element_type=f32)

    # --------------------- fuse + gate: out = y + w*(x - y) ------------------
    x2 = l4 + bl2_ref[...] + g4b
    w = jax.nn.sigmoid(x2)
    out_ref[0] = (y + w * (x - y)).astype(out_ref.dtype)


def _vmem_limit_bytes():
    """Explicit scoped-VMEM limit from the chip (64 MiB/TC v7x, 128 MiB
    v5e/v6e), leaving 1/4 of physical VMEM (and never asking > 100 MiB) for
    Mosaic-internal buffers.  Never rely on the 16/32 MiB scoped default."""
    cap = 64 * 1024 * 1024
    try:
        info = pltpu.get_tpu_info()
        cap = int(getattr(info, "vmem_capacity_bytes", cap))
    except Exception:
        pass
    return max(32 * 1024 * 1024, min(3 * cap // 4, 100 * 1024 * 1024))


def _block_bytes(R, L, Lr, tT, bblk, Cr, io_bytes, dot_bytes, const_buf):
    """Conservative per-grid-step VMEM footprint (bytes)."""
    io = 2 * 2 * R * L * io_bytes + 2 * R * L * 4         # x, y (2-buf) + out (f32, 2-buf)
    kron = 2 * L * Lr * dot_bytes * const_buf              # wl1k + wl2k
    aux = 2 * L * tT * dot_bytes * const_buf                # pool + bcast
    gw = (2 * (bblk * Cr) * R * dot_bytes + (bblk * Cr) ** 2 * 4) * const_buf
    small = (3 * R + 4 * bblk * Cr + 2 * Lr + L) * 4 * const_buf
    inter = (12 * R * L + 8 * R * Lr + 8 * R * tT) * 4      # ~12 live (R,L) f32 temps
    return io + kron + aux + gw + small + inter


def _choose_tiles(B, C, T, F, Fr, Cr, io_bytes, dot_bytes, const_buf, budget,
                  *, batch_block=None, l_target=512, l_max=1024, row_cap=256):
    """Pick (tT, Bblk): cap the lane width near the HBM-roofline sweet spot so
    kron zero-padding never makes the kernel MXU-bound, then grow the block by
    folding batch elements into the sublane / MXU-M dim."""
    cands = [t for t in range(1, T + 1)
             if T % t == 0 and (t == T or (t * F) % 128 == 0)]

    def pick(pool):
        # Prefer Lr = tT*F//r also a multiple of 128 (avoids a padded MXU N/K
        # dim; biggest effect on v5e's 128-wide, worse on 256-wide v6e/v7x).
        pref = [t for t in pool if (t * Fr) % 128 == 0]
        return max(pref or pool, key=lambda t: t * F)

    in_target = [t for t in cands if 128 <= t * F <= l_target]
    in_max = [t for t in cands if t * F <= l_max]
    if in_target:
        tT = pick(in_target)
    elif in_max:
        tT = pick(in_max)
    else:
        tT = min(cands, key=lambda t: t * F)

    def bblk_ok(b):
        return B % b == 0 and (b == 1 or C % 8 == 0) and b * C <= row_cap

    def fits(t, b):
        return _block_bytes(b * C, t * F, t * Fr, t, b, Cr,
                            io_bytes, dot_bytes, const_buf) <= budget

    if batch_block is not None:
        if not (bblk_ok(batch_block) and fits(tT, batch_block)):
            raise ValueError(f"batch_block={batch_block} invalid or over VMEM budget")
        return tT, batch_block

    good = [b for b in range(1, B + 1) if bblk_ok(b) and fits(tT, b)]
    if good:
        return tT, max(good)
    # Chosen tT doesn't fit even unbatched: shrink the lane width before giving up.
    for t2 in sorted(cands, key=lambda t: t * F):
        if fits(t2, 1):
            return t2, 1
    raise ValueError(
        "MS_CAM_F pallas kernel: no (tT, batch_block) tiling fits the VMEM "
        f"budget ({budget} bytes) for B={B}, C={C}, T={T}, F={F}; an F "
        "sub-tiling fallback is required for this configuration.")


def ms_cam_f(x, y, params, *, dot_dtype=jnp.bfloat16, io_dtype=jnp.float32,
             single_buffer_consts=True, batch_block=None):
    """x, y: (B, C, T, F) float32.  params: dict of natural-shaped weights.

    dot_dtype: dtype of the MXU matmul operands (bf16 default; f32 = exact
    path, test-only -- never benchmark it).  io_dtype: streaming dtype of x/y
    (bf16 ~halves HBM traffic; numerics change, so gated behind the flag).
    """
    B, C, T, F = x.shape
    Cr = params["Wg1"].shape[0]
    Fr = params["Wl1"].shape[0]
    f32 = jnp.float32

    vmem_limit = _vmem_limit_bytes()
    budget = vmem_limit - 8 * 1024 * 1024            # headroom for Mosaic scratch
    dot_bytes = jnp.dtype(dot_dtype).itemsize
    io_bytes = jnp.dtype(io_dtype).itemsize
    const_buf = 1 if single_buffer_consts else 2

    tT, Bblk = _choose_tiles(B, C, T, F, Fr, Cr, io_bytes, dot_bytes, const_buf,
                             budget, batch_block=batch_block)
    L, Lr, R = tT * F, tT * Fr, Bblk * C

    # Block-diagonal (kron) forms of the two local 1x1 convs plus 1/F-pool and
    # 0/1-broadcast matrices: the whole local branch, the F-avg-pool and the
    # global-branch broadcast run directly on the lane-dense layout.
    eye_t = jnp.eye(tT, dtype=f32)
    wl1k = jnp.kron(eye_t, params["Wl1"].T.astype(f32)).astype(dot_dtype)      # (L, Lr)
    wl2k = jnp.kron(eye_t, params["Wl2"].T.astype(f32)).astype(dot_dtype)      # (Lr, L)
    pool = jnp.kron(eye_t, jnp.full((F, 1), 1.0 / F, f32)).astype(dot_dtype)   # (L, tT)
    bcast = jnp.kron(eye_t, jnp.ones((1, F), f32)).astype(dot_dtype)           # (tT, L)

    eye_b = jnp.eye(Bblk, dtype=f32)
    wg1 = jnp.kron(eye_b, params["Wg1"].astype(f32)).astype(dot_dtype)         # (Bblk*Cr, R)
    wg2 = jnp.kron(eye_b, params["Wg2"].astype(f32)).astype(dot_dtype)         # (R, Bblk*Cr)
    mg = jnp.kron(eye_b, jnp.full((Cr, Cr), 1.0 / Cr, f32))                    # f32 LN mean

    gcol = jnp.tile(jnp.stack([params["bg1"], params["gamma_g"],
                               params["beta_g"], params["a_g"]],
                              axis=1).astype(f32), (Bblk, 1))                  # (Bblk*Cr, 4)
    lcol = jnp.tile(jnp.stack([params["gamma_l"], params["beta_l"],
                               params["bg2"]], axis=1).astype(f32), (Bblk, 1)) # (R, 3)
    lrow = jnp.stack([jnp.tile(params["bl1"], tT),
                      jnp.tile(params["a_l"], tT)], axis=0).astype(f32)        # (2, Lr)
    bl2row = jnp.tile(params["bl2"], tT).reshape(1, L).astype(f32)             # (1, L)

    consts = [wl1k, wl2k, pool, bcast, wg1, wg2, mg, gcol, lcol, lrow, bl2row]

    # Lane-dense I/O with the batch sub-block folded into the sublane dim
    # (free HBM reshapes; C % 8 == 0 whenever Bblk > 1).
    xf = x.reshape(B // Bblk, R, T * F).astype(io_dtype)
    yf = y.reshape(B // Bblk, R, T * F).astype(io_dtype)

    data_spec = pl.BlockSpec((1, R, L), lambda b, j: (b, 0, j))

    def const_spec(a, buffered):
        nd = a.ndim
        idx = lambda b, j, _n=nd: (0,) * _n
        if buffered:
            # Constant index_map -> never re-DMAed; single-buffer to halve
            # their VMEM footprint (matters most under v7x's 64 MiB/TC).
            return pl.BlockSpec(a.shape, idx, pipeline_mode=pl.Buffered(1))
        return pl.BlockSpec(a.shape, idx)

    # Advisory cost hint with the real (kron-inflated) FLOPs / bytes.
    steps = (B // Bblk) * (T // tT)
    macs = (R * L * Lr + R * L * tT + R * Lr * L + R * tT * L
            + 2 * (Bblk * Cr) * R * tT + 2 * (Bblk * Cr) ** 2 * tT)
    consts_bytes = sum(int(a.size) * jnp.dtype(a.dtype).itemsize for a in consts)
    cost = pl.CostEstimate(
        flops=int(steps * (2 * macs + 12 * R * L)),
        transcendentals=int(steps * (R * L + R * Lr + 2 * R * tT)),
        bytes_accessed=int(2 * x.size * io_bytes + x.size * 4 + consts_bytes))

    def build(buffered):
        grid_spec = pltpu.PrefetchScalarGridSpec(
            num_scalar_prefetch=0,
            grid=(B // Bblk, T // tT),
            in_specs=[data_spec, data_spec] + [const_spec(a, buffered) for a in consts],
            out_specs=data_spec)
        return pl.pallas_call(
            functools.partial(ms_cam_f_kernel, bblk=Bblk, c=C),
            out_shape=jax.ShapeDtypeStruct((B // Bblk, R, T * F), f32),
            grid_spec=grid_spec,
            compiler_params=pltpu.CompilerParams(
                dimension_semantics=("parallel", "parallel"),
                vmem_limit_bytes=vmem_limit),
            cost_estimate=cost)

    args = (xf, yf, *consts)
    if single_buffer_consts:
        try:
            out_flat = build(True)(*args)
        except Exception:
            # jax without BlockSpec.pipeline_mode / Buffered(1): fall back to
            # default double-buffered constants (correctness unaffected).
            out_flat = build(False)(*args)
    else:
        out_flat = build(False)(*args)
    return out_flat.reshape(B, C, T, F)


def ms_cam_f_reference(x, y, p, dot_dtype=jnp.float32):
    """Pure-JAX reference of the (shape-consistent) forward pass.

    dot_dtype=float32 is the plain fp32 spec; bfloat16 mirrors the kernel's
    cast-operands-at-the-dot / accumulate-in-fp32 numerics."""
    f32 = jnp.float32
    dd = dot_dtype
    hp = lax.Precision.HIGHEST
    F = x.shape[-1]
    x_ = x + y
    xd = x_.astype(dd)

    # global branch
    inv_f = jnp.asarray(1.0 / F, dtype=dd).astype(f32)
    g0 = jnp.sum(xd.astype(f32) * inv_f, axis=3)                               # (B, C, T)
    g1 = jnp.einsum("oc,bct->bot", p["Wg1"].astype(dd), g0.astype(dd),
                    preferred_element_type=f32, precision=hp) + p["bg1"][None, :, None]
    mu = jnp.mean(g1, axis=1, keepdims=True)
    var = jnp.mean((g1 - mu) ** 2, axis=1, keepdims=True)
    g2 = (g1 - mu) / jnp.sqrt(var + EPS) * p["gamma_g"][None, :, None] \
         + p["beta_g"][None, :, None]
    g3 = jnp.where(g2 >= 0.0, g2, p["a_g"][None, :, None] * g2)
    g4 = jnp.einsum("co,bot->bct", p["Wg2"].astype(dd), g3.astype(dd),
                    preferred_element_type=f32, precision=hp) + p["bg2"][None, :, None]
    g4 = g4.astype(dd).astype(f32)     # mirrors the kernel's broadcast-matmul operand cast

    # local branch
    l1 = jnp.einsum("gf,bctf->bctg", p["Wl1"].astype(dd), xd,
                    preferred_element_type=f32, precision=hp) + p["bl1"]
    mu_l = jnp.mean(l1, axis=1, keepdims=True)
    var_l = jnp.mean((l1 - mu_l) ** 2, axis=1, keepdims=True)
    l2 = (l1 - mu_l) / jnp.sqrt(var_l + EPS) * p["gamma_l"][None, :, None, None] \
         + p["beta_l"][None, :, None, None]
    l3 = jnp.where(l2 >= 0.0, l2, p["a_l"][None, None, None, :] * l2)
    l4 = jnp.einsum("fg,bctg->bctf", p["Wl2"].astype(dd), l3.astype(dd),
                    preferred_element_type=f32, precision=hp) + p["bl2"]

    x2 = l4 + g4[..., None]
    w = jax.nn.sigmoid(x2)
    return x * w + (1.0 - w) * y


def make_params(C, F, r, key):
    Cr, Fr = C // r, F // r
    ks = jax.random.split(key, 12)
    f32 = jnp.float32
    return {
        "Wg1": 0.3 * jax.random.normal(ks[0], (Cr, C), f32),
        "bg1": 0.1 * jax.random.normal(ks[1], (Cr,), f32),
        "gamma_g": 1.0 + 0.1 * jax.random.normal(ks[2], (Cr,), f32),
        "beta_g": 0.05 * jax.random.normal(ks[3], (Cr,), f32),
        "a_g": jnp.full((Cr,), 0.25, f32),      # PyTorch PReLU default init
        "Wg2": 0.3 * jax.random.normal(ks[4], (C, Cr), f32),
        "bg2": 0.1 * jax.random.normal(ks[5], (C,), f32),
        "Wl1": 0.3 * jax.random.normal(ks[6], (Fr, F), f32),
        "bl1": 0.1 * jax.random.normal(ks[7], (Fr,), f32),
        "gamma_l": 1.0 + 0.1 * jax.random.normal(ks[8], (C,), f32),
        "beta_l": 0.05 * jax.random.normal(ks[9], (C,), f32),
        "a_l": jnp.full((Fr,), 0.25, f32),
        "Wl2": 0.3 * jax.random.normal(ks[10], (F, Fr), f32),
        "bl2": 0.1 * jax.random.normal(ks[11], (F,), f32),
    }


if __name__ == "__main__":
    B, C, T, F, r = 2, 8, 16, 16, 2

    key = jax.random.PRNGKey(0)
    kx, ky = jax.random.split(key)
    x = jax.random.normal(kx, (B, C, T, F), jnp.float32)
    y = jax.random.normal(ky, (B, C, T, F), jnp.float32)
    params = make_params(C, F, r, jax.random.PRNGKey(1))

    # Default perf path (bf16 MXU operands, f32 accumulate / LN / gating,
    # batch-folded block): tight structural check vs a numerics-matched
    # pure-JAX reference.
    out = jax.block_until_ready(ms_cam_f(x, y, params))
    ref_bf16 = jax.block_until_ready(ms_cam_f_reference(x, y, params, jnp.bfloat16))
    assert out.shape == (B, C, T, F)
    err = float(jnp.max(jnp.abs(out - ref_bf16)))
    assert err < 2e-3, f"bf16 kernel mismatch vs matched reference: {err}"

    # Same kernel forced to batch_block=1: exercises the other LayerNorm
    # reduction path (no batch folding) against the same matched reference.
    out_b1 = jax.block_until_ready(ms_cam_f(x, y, params, batch_block=1))
    err = float(jnp.max(jnp.abs(out_b1 - ref_bf16)))
    assert err < 2e-3, f"batch_block=1 kernel mismatch vs matched reference: {err}"

    # fp32-operand path vs the plain fp32 spec reference.  Loose tolerance
    # because the MXU's fp32-operand emulation precision is generation /
    # compiler dependent; the 2e-3 structural checks above are the tight ones.
    out_f32 = jax.block_until_ready(ms_cam_f(x, y, params, dot_dtype=jnp.float32))
    ref_f32 = jax.block_until_ready(ms_cam_f_reference(x, y, params, jnp.float32))
    err = float(jnp.max(jnp.abs(out_f32 - ref_f32)))
    assert err < 1e-1, f"f32 kernel mismatch vs spec reference: {err}"

    # Optional bandwidth-saving path (bf16-streamed x/y, f32 output): only
    # input rounding separates it from the default path.
    out_io = jax.block_until_ready(ms_cam_f(x, y, params, io_dtype=jnp.bfloat16))
    err = float(jnp.max(jnp.abs(out_io - out)))
    assert err < 1e-1, f"bf16-I/O path deviates from the f32-I/O path: {err}"

    print("KERNEL_OK")
</pallas_src>

<mosaic_0001>
module attributes {stable_mosaic.version = 11 : i64} {
  func.func @ms_cam_f_kernel(%arg0: i32, %arg1: i32, %arg2: memref<1x16x256xf32, #tpu.memory_space<vmem>>, %arg3: memref<1x16x256xf32, #tpu.memory_space<vmem>>, %arg4: memref<256x128xbf16, #tpu.memory_space<vmem>>, %arg5: memref<128x256xbf16, #tpu.memory_space<vmem>>, %arg6: memref<256x16xbf16, #tpu.memory_space<vmem>>, %arg7: memref<16x256xbf16, #tpu.memory_space<vmem>>, %arg8: memref<8x16xbf16, #tpu.memory_space<vmem>>, %arg9: memref<16x8xbf16, #tpu.memory_space<vmem>>, %arg10: memref<8x8xf32, #tpu.memory_space<vmem>>, %arg11: memref<8x4xf32, #tpu.memory_space<vmem>>, %arg12: memref<16x3xf32, #tpu.memory_space<vmem>>, %arg13: memref<2x128xf32, #tpu.memory_space<vmem>>, %arg14: memref<1x256xf32, #tpu.memory_space<vmem>>, %arg15: memref<1x16x256xf32, #tpu.memory_space<vmem>>) attributes {dimension_semantics = [#tpu.dimension_semantics<parallel>, #tpu.dimension_semantics<parallel>], iteration_bounds = array<i64: 1, 1>, scalar_prefetch = 0 : i64, scratch_operands = 0 : i64, tpu.core_type = #tpu.core_type<tc>, window_params = [{transform_indices = @transform_0, window_bounds = array<i64: 1, 16, 256>}, {transform_indices = @transform_1, window_bounds = array<i64: 1, 16, 256>}, {pipeline_mode = #tpu.pipeline_mode<synchronous>, transform_indices = @transform_2, window_bounds = array<i64: 256, 128>}, {pipeline_mode = #tpu.pipeline_mode<synchronous>, transform_indices = @transform_3, window_bounds = array<i64: 128, 256>}, {pipeline_mode = #tpu.pipeline_mode<synchronous>, transform_indices = @transform_4, window_bounds = array<i64: 256, 16>}, {pipeline_mode = #tpu.pipeline_mode<synchronous>, transform_indices = @transform_5, window_bounds = array<i64: 16, 256>}, {pipeline_mode = #tpu.pipeline_mode<synchronous>, transform_indices = @transform_6, window_bounds = array<i64: 8, 16>}, {pipeline_mode = #tpu.pipeline_mode<synchronous>, transform_indices = @transform_7, window_bounds = array<i64: 16, 8>}, {pipeline_mode = #tpu.pipeline_mode<synchronous>, transform_indices = @transform_8, window_bounds = array<i64: 8, 8>}, {pipeline_mode = #tpu.pipeline_mode<synchronous>, transform_indices = @transform_9, window_bounds = array<i64: 8, 4>}, {pipeline_mode = #tpu.pipeline_mode<synchronous>, transform_indices = @transform_10, window_bounds = array<i64: 16, 3>}, {pipeline_mode = #tpu.pipeline_mode<synchronous>, transform_indices = @transform_11, window_bounds = array<i64: 2, 128>}, {pipeline_mode = #tpu.pipeline_mode<synchronous>, transform_indices = @transform_12, window_bounds = array<i64: 1, 256>}, {transform_indices = @transform_13, window_bounds = array<i64: 1, 16, 256>}]} {
    %c0 = arith.constant 0 : index
    %c0_0 = arith.constant 0 : index
    %c0_1 = arith.constant 0 : index
    %0 = vector.load %arg2[%c0, %c0_0, %c0_1] : memref<1x16x256xf32, #tpu.memory_space<vmem>>, vector<1x16x256xf32>
    %1 = vector.shape_cast %0 : vector<1x16x256xf32> to vector<16x256xf32>
    %c0_2 = arith.constant 0 : index
    %c0_3 = arith.constant 0 : index
    %c0_4 = arith.constant 0 : index
    %2 = vector.load %arg3[%c0_2, %c0_3, %c0_4] : memref<1x16x256xf32, #tpu.memory_space<vmem>>, vector<1x16x256xf32>
    %3 = vector.shape_cast %2 : vector<1x16x256xf32> to vector<16x256xf32>
    %4 = arith.addf %1, %3 : vector<16x256xf32>
    %5 = arith.truncf %4 : vector<16x256xf32> to vector<16x256xbf16>
    %c0_5 = arith.constant 0 : index
    %c0_6 = arith.constant 0 : index
    %6 = vector.load %arg4[%c0_5, %c0_6] : memref<256x128xbf16, #tpu.memory_space<vmem>>, vector<256x128xbf16>
    %cst = arith.constant dense<0.000000e+00> : vector<16x128xf32>
    %7 = tpu.matmul %5, %6, %cst {dimension_numbers = #tpu.dot_dimension_numbers<[1], [0], [0], [1], [0, 0, 1, 1], [], []>} : vector<16x256xbf16>, vector<256x128xbf16>, vector<16x128xf32> -> vector<16x128xf32>
    %c0_7 = arith.constant 0 : index
    %c0_8 = arith.constant 0 : index
    %8 = vector.load %arg6[%c0_7, %c0_8] : memref<256x16xbf16, #tpu.memory_space<vmem>>, vector<256x16xbf16>
    %cst_9 = arith.constant dense<0.000000e+00> : vector<16x16xf32>
    %9 = tpu.matmul %5, %8, %cst_9 {dimension_numbers = #tpu.dot_dimension_numbers<[1], [0], [0], [1], [0, 0, 1, 1], [], []>} : vector<16x256xbf16>, vector<256x16xbf16>, vector<16x16xf32> -> vector<16x16xf32>
    %c0_10 = arith.constant 0 : index
    %c0_11 = arith.constant 0 : index
    %10 = vector.load %arg11[%c0_10, %c0_11] : memref<8x4xf32, #tpu.memory_space<vmem>>, vector<8x4xf32>
    %c0_12 = arith.constant 0 : index
    %c0_13 = arith.constant 0 : index
    %11 = vector.load %arg8[%c0_12, %c0_13] : memref<8x16xbf16, #tpu.memory_space<vmem>>, vector<8x16xbf16>
    %12 = arith.truncf %9 : vector<16x16xf32> to vector<16x16xbf16>
    %cst_14 = arith.constant dense<0.000000e+00> : vector<8x16xf32>
    %13 = tpu.matmul %11, %12, %cst_14 {dimension_numbers = #tpu.dot_dimension_numbers<[1], [0], [0], [1], [0, 0, 1, 1], [], []>} : vector<8x16xbf16>, vector<16x16xbf16>, vector<8x16xf32> -> vector<8x16xf32>
    %14 = vector.extract_strided_slice %10 {offsets = [0, 0], sizes = [8, 1], strides = [1, 1]} : vector<8x4xf32> to vector<8x1xf32>
    %15 = vector.broadcast %14 : vector<8x1xf32> to vector<8x16xf32>
    %16 = arith.addf %13, %15 : vector<8x16xf32>
    %c0_15 = arith.constant 0 : index
    %c0_16 = arith.constant 0 : index
    %17 = vector.load %arg10[%c0_15, %c0_16] : memref<8x8xf32, #tpu.memory_space<vmem>>, vector<8x8xf32>
    %cst_17 = arith.constant dense<0.000000e+00> : vector<8x16xf32>
    %18 = tpu.matmul %17, %16, %cst_17 {dimension_numbers = #tpu.dot_dimension_numbers<[1], [0], [0], [1], [0, 0, 1, 1], [], []>} : vector<8x8xf32>, vector<8x16xf32>, vector<8x16xf32> -> vector<8x16xf32>
    %19 = arith.subf %16, %18 : vector<8x16xf32>
    %20 = arith.mulf %19, %19 : vector<8x16xf32>
    %cst_18 = arith.constant dense<0.000000e+00> : vector<8x16xf32>
    %21 = tpu.matmul %17, %20, %cst_18 {dimension_numbers = #tpu.dot_dimension_numbers<[1], [0], [0], [1], [0, 0, 1, 1], [], []>} : vector<8x8xf32>, vector<8x16xf32>, vector<8x16xf32> -> vector<8x16xf32>
    %22 = arith.subf %16, %18 : vector<8x16xf32>
    %cst_19 = arith.constant 9.99999974E-6 : f32
    %23 = vector.broadcast %cst_19 : f32 to vector<8x16xf32>
    %24 = arith.addf %21, %23 : vector<8x16xf32>
    %25 = math.rsqrt %24 : vector<8x16xf32>
    %26 = arith.mulf %22, %25 : vector<8x16xf32>
    %27 = vector.extract_strided_slice %10 {offsets = [0, 1], sizes = [8, 1], strides = [1, 1]} : vector<8x4xf32> to vector<8x1xf32>
    %28 = vector.broadcast %27 : vector<8x1xf32> to vector<8x16xf32>
    %29 = arith.mulf %26, %28 : vector<8x16xf32>
    %30 = vector.extract_strided_slice %10 {offsets = [0, 2], sizes = [8, 1], strides = [1, 1]} : vector<8x4xf32> to vector<8x1xf32>
    %31 = vector.broadcast %30 : vector<8x1xf32> to vector<8x16xf32>
    %32 = arith.addf %29, %31 : vector<8x16xf32>
    %cst_20 = arith.constant 0.000000e+00 : f32
    %33 = vector.broadcast %cst_20 : f32 to vector<8x16xf32>
    %34 = arith.cmpf oge, %32, %33 : vector<8x16xf32>
    %35 = vector.extract_strided_slice %10 {offsets = [0, 3], sizes = [8, 1], strides = [1, 1]} : vector<8x4xf32> to vector<8x1xf32>
    %36 = vector.broadcast %35 : vector<8x1xf32> to vector<8x16xf32>
    %37 = arith.mulf %36, %32 : vector<8x16xf32>
    %38 = arith.select %34, %32, %37 : vector<8x16xi1>, vector<8x16xf32>
    %c0_21 = arith.constant 0 : index
    %c0_22 = arith.constant 0 : index
    %39 = vector.load %arg9[%c0_21, %c0_22] : memref<16x8xbf16, #tpu.memory_space<vmem>>, vector<16x8xbf16>
    %40 = arith.truncf %38 : vector<8x16xf32> to vector<8x16xbf16>
    %cst_23 = arith.constant dense<0.000000e+00> : vector<16x16xf32>
    %41 = tpu.matmul %39, %40, %cst_23 {dimension_numbers = #tpu.dot_dimension_numbers<[1], [0], [0], [1], [0, 0, 1, 1], [], []>} : vector<16x8xbf16>, vector<8x16xbf16>, vector<16x16xf32> -> vector<16x16xf32>
    %c0_24 = arith.constant 0 : index
    %c2 = arith.constant 2 : index
    %42 = vector.load %arg12[%c0_24, %c2] : memref<16x3xf32, #tpu.memory_space<vmem>>, vector<16x1xf32>
    %43 = vector.broadcast %42 : vector<16x1xf32> to vector<16x16xf32>
    %44 = arith.addf %41, %43 : vector<16x16xf32>
    %45 = arith.truncf %44 : vector<16x16xf32> to vector<16x16xbf16>
    %c0_25 = arith.constant 0 : index
    %c0_26 = arith.constant 0 : index
    %46 = vector.load %arg7[%c0_25, %c0_26] : memref<16x256xbf16, #tpu.memory_space<vmem>>, vector<16x256xbf16>
    %cst_27 = arith.constant dense<0.000000e+00> : vector<16x256xf32>
    %47 = tpu.matmul %45, %46, %cst_27 {dimension_numbers = #tpu.dot_dimension_numbers<[1], [0], [0], [1], [0, 0, 1, 1], [], []>} : vector<16x16xbf16>, vector<16x256xbf16>, vector<16x256xf32> -> vector<16x256xf32>
    %c0_28 = arith.constant 0 : index
    %c0_29 = arith.constant 0 : index
    %48 = vector.load %arg13[%c0_28, %c0_29] : memref<2x128xf32, #tpu.memory_space<vmem>>, vector<2x128xf32>
    %c0_30 = arith.constant 0 : index
    %c0_31 = arith.constant 0 : index
    %49 = vector.load %arg12[%c0_30, %c0_31] : memref<16x3xf32, #tpu.memory_space<vmem>>, vector<16x3xf32>
    %50 = vector.extract_strided_slice %48 {offsets = [0, 0], sizes = [1, 128], strides = [1, 1]} : vector<2x128xf32> to vector<1x128xf32>
    %51 = vector.broadcast %50 : vector<1x128xf32> to vector<16x128xf32>
    %52 = arith.addf %7, %51 : vector<16x128xf32>
    %53 = vector.shape_cast %52 : vector<16x128xf32> to vector<2x8x128xf32>
    %cst_32 = arith.constant dense<0.000000e+00> : vector<2x128xf32>
    %54 = vector.multi_reduction <add>, %53, %cst_32 [1] : vector<2x8x128xf32> to vector<2x128xf32>
    %55 = vector.shape_cast %54 : vector<2x128xf32> to vector<2x1x128xf32>
    %cst_33 = arith.constant 8.000000e+00 : f32
    %56 = vector.broadcast %cst_33 : f32 to vector<2x1x128xf32>
    %57 = arith.divf %55, %56 : vector<2x1x128xf32>
    %58 = vector.broadcast %57 : vector<2x1x128xf32> to vector<2x8x128xf32>
    %59 = arith.subf %53, %58 : vector<2x8x128xf32>
    %60 = arith.mulf %59, %59 : vector<2x8x128xf32>
    %cst_34 = arith.constant dense<0.000000e+00> : vector<2x128xf32>
    %61 = vector.multi_reduction <add>, %60, %cst_34 [1] : vector<2x8x128xf32> to vector<2x128xf32>
    %62 = vector.shape_cast %61 : vector<2x128xf32> to vector<2x1x128xf32>
    %cst_35 = arith.constant 8.000000e+00 : f32
    %63 = vector.broadcast %cst_35 : f32 to vector<2x1x128xf32>
    %64 = arith.divf %62, %63 : vector<2x1x128xf32>
    %65 = vector.broadcast %57 : vector<2x1x128xf32> to vector<2x8x128xf32>
    %66 = arith.subf %53, %65 : vector<2x8x128xf32>
    %cst_36 = arith.constant 9.99999974E-6 : f32
    %67 = vector.broadcast %cst_36 : f32 to vector<2x1x128xf32>
    %68 = arith.addf %64, %67 : vector<2x1x128xf32>
    %69 = math.rsqrt %68 : vector<2x1x128xf32>
    %70 = vector.broadcast %69 : vector<2x1x128xf32> to vector<2x8x128xf32>
    %71 = arith.mulf %66, %70 : vector<2x8x128xf32>
    %72 = vector.shape_cast %71 : vector<2x8x128xf32> to vector<16x128xf32>
    %73 = vector.extract_strided_slice %49 {offsets = [0, 0], sizes = [16, 1], strides = [1, 1]} : vector<16x3xf32> to vector<16x1xf32>
    %74 = vector.broadcast %73 : vector<16x1xf32> to vector<16x128xf32>
    %75 = arith.mulf %72, %74 : vector<16x128xf32>
    %76 = vector.extract_strided_slice %49 {offsets = [0, 1], sizes = [16, 1], strides = [1, 1]} : vector<16x3xf32> to vector<16x1xf32>
    %77 = vector.broadcast %76 : vector<16x1xf32> to vector<16x128xf32>
    %78 = arith.addf %75, %77 : vector<16x128xf32>
    %cst_37 = arith.constant 0.000000e+00 : f32
    %79 = vector.broadcast %cst_37 : f32 to vector<16x128xf32>
    %80 = arith.cmpf oge, %78, %79 : vector<16x128xf32>
    %81 = vector.extract_strided_slice %48 {offsets = [1, 0], sizes = [1, 128], strides = [1, 1]} : vector<2x128xf32> to vector<1x128xf32>
    %82 = vector.broadcast %81 : vector<1x128xf32> to vector<16x128xf32>
    %83 = arith.mulf %82, %78 : vector<16x128xf32>
    %84 = arith.select %80, %78, %83 : vector<16x128xi1>, vector<16x128xf32>
    %85 = arith.truncf %84 : vector<16x128xf32> to vector<16x128xbf16>
    %c0_38 = arith.constant 0 : index
    %c0_39 = arith.constant 0 : index
    %86 = vector.load %arg5[%c0_38, %c0_39] : memref<128x256xbf16, #tpu.memory_space<vmem>>, vector<128x256xbf16>
    %cst_40 = arith.constant dense<0.000000e+00> : vector<16x256xf32>
    %87 = tpu.matmul %85, %86, %cst_40 {dimension_numbers = #tpu.dot_dimension_numbers<[1], [0], [0], [1], [0, 0, 1, 1], [], []>} : vector<16x128xbf16>, vector<128x256xbf16>, vector<16x256xf32> -> vector<16x256xf32>
    %c0_41 = arith.constant 0 : index
    %c0_42 = arith.constant 0 : index
    %88 = vector.load %arg14[%c0_41, %c0_42] : memref<1x256xf32, #tpu.memory_space<vmem>>, vector<1x256xf32>
    %89 = vector.broadcast %88 : vector<1x256xf32> to vector<16x256xf32>
    %90 = arith.addf %87, %89 : vector<16x256xf32>
    %91 = arith.addf %90, %47 : vector<16x256xf32>
    %92 = arith.negf %91 : vector<16x256xf32>
    %93 = math.exp %92 : vector<16x256xf32>
    %cst_43 = arith.constant 1.000000e+00 : f32
    %94 = vector.broadcast %cst_43 : f32 to vector<16x256xf32>
    %95 = arith.addf %94, %93 : vector<16x256xf32>
    %96 = arith.divf %94, %95 : vector<16x256xf32>
    %97 = arith.subf %1, %3 : vector<16x256xf32>
    %98 = arith.mulf %96, %97 : vector<16x256xf32>
    %99 = arith.addf %3, %98 : vector<16x256xf32>
    %c0_44 = arith.constant 0 : index
    %c0_45 = arith.constant 0 : index
    %c0_46 = arith.constant 0 : index
    %100 = vector.load %arg15[%c0_44, %c0_45, %c0_46] : memref<1x16x256xf32, #tpu.memory_space<vmem>>, vector<1x16x256xf32>
    %101 = vector.shape_cast %100 : vector<1x16x256xf32> to vector<16x256xf32>
    %102 = vector.shape_cast %99 : vector<16x256xf32> to vector<1x16x256xf32>
    tpu.vector_store %arg15[%c0_44, %c0_45, %c0_46], %102 {strides = array<i32>} : memref<1x16x256xf32, #tpu.memory_space<vmem>>, vector<1x16x256xf32>,
    return
  }
  func.func @transform_0(%arg0: i32, %arg1: i32) -> (i32, i32, i32) {
    %c0_i32 = arith.constant 0 : i32
    %c0_i32_0 = arith.constant 0 : i32
    return %arg0, %c0_i32, %arg1 : i32, i32, i32
  }
  func.func @transform_1(%arg0: i32, %arg1: i32) -> (i32, i32, i32) {
    %c0_i32 = arith.constant 0 : i32
    %c0_i32_0 = arith.constant 0 : i32
    return %arg0, %c0_i32, %arg1 : i32, i32, i32
  }
  func.func @transform_2(%arg0: i32, %arg1: i32) -> (i32, i32) {
    %c0_i32 = arith.constant 0 : i32
    %c0_i32_0 = arith.constant 0 : i32
    %c0_i32_1 = arith.constant 0 : i32
    return %c0_i32, %c0_i32_0 : i32, i32
  }
  func.func @transform_3(%arg0: i32, %arg1: i32) -> (i32, i32) {
    %c0_i32 = arith.constant 0 : i32
    %c0_i32_0 = arith.constant 0 : i32
    %c0_i32_1 = arith.constant 0 : i32
    return %c0_i32, %c0_i32_0 : i32, i32
  }
  func.func @transform_4(%arg0: i32, %arg1: i32) -> (i32, i32) {
    %c0_i32 = arith.constant 0 : i32
    %c0_i32_0 = arith.constant 0 : i32
    %c0_i32_1 = arith.constant 0 : i32
    return %c0_i32, %c0_i32_0 : i32, i32
  }
  func.func @transform_5(%arg0: i32, %arg1: i32) -> (i32, i32) {
    %c0_i32 = arith.constant 0 : i32
    %c0_i32_0 = arith.constant 0 : i32
    %c0_i32_1 = arith.constant 0 : i32
    return %c0_i32, %c0_i32_0 : i32, i32
  }
  func.func @transform_6(%arg0: i32, %arg1: i32) -> (i32, i32) {
    %c0_i32 = arith.constant 0 : i32
    %c0_i32_0 = arith.constant 0 : i32
    %c0_i32_1 = arith.constant 0 : i32
    return %c0_i32, %c0_i32_0 : i32, i32
  }
  func.func @transform_7(%arg0: i32, %arg1: i32) -> (i32, i32) {
    %c0_i32 = arith.constant 0 : i32
    %c0_i32_0 = arith.constant 0 : i32
    %c0_i32_1 = arith.constant 0 : i32
    return %c0_i32, %c0_i32_0 : i32, i32
  }
  func.func @transform_8(%arg0: i32, %arg1: i32) -> (i32, i32) {
    %c0_i32 = arith.constant 0 : i32
    %c0_i32_0 = arith.constant 0 : i32
    %c0_i32_1 = arith.constant 0 : i32
    return %c0_i32, %c0_i32_0 : i32, i32
  }
  func.func @transform_9(%arg0: i32, %arg1: i32) -> (i32, i32) {
    %c0_i32 = arith.constant 0 : i32
    %c0_i32_0 = arith.constant 0 : i32
    %c0_i32_1 = arith.constant 0 : i32
    return %c0_i32, %c0_i32_0 : i32, i32
  }
  func.func @transform_10(%arg0: i32, %arg1: i32) -> (i32, i32) {
    %c0_i32 = arith.constant 0 : i32
    %c0_i32_0 = arith.constant 0 : i32
    %c0_i32_1 = arith.constant 0 : i32
    return %c0_i32, %c0_i32_0 : i32, i32
  }
  func.func @transform_11(%arg0: i32, %arg1: i32) -> (i32, i32) {
    %c0_i32 = arith.constant 0 : i32
    %c0_i32_0 = arith.constant 0 : i32
    %c0_i32_1 = arith.constant 0 : i32
    return %c0_i32, %c0_i32_0 : i32, i32
  }
  func.func @transform_12(%arg0: i32, %arg1: i32) -> (i32, i32) {
    %c0_i32 = arith.constant 0 : i32
    %c0_i32_0 = arith.constant 0 : i32
    %c0_i32_1 = arith.constant 0 : i32
    return %c0_i32, %c0_i32_0 : i32, i32
  }
  func.func @transform_13(%arg0: i32, %arg1: i32) -> (i32, i32, i32) {
    %c0_i32 = arith.constant 0 : i32
    %c0_i32_0 = arith.constant 0 : i32
    return %arg0, %c0_i32, %arg1 : i32, i32, i32
  }
}

module attributes {stable_mosaic.version = 11 : i64} {
  func.func @ms_cam_f_kernel(%arg0: i32, %arg1: i32, %arg2: memref<1x16x256xf32, #tpu.memory_space<vmem>>, %arg3: memref<1x16x256xf32, #tpu.memory_space<vmem>>, %arg4: memref<256x128xbf16, #tpu.memory_space<vmem>>, %arg5: memref<128x256xbf16, #tpu.memory_space<vmem>>, %arg6: memref<256x16xbf16, #tpu.memory_space<vmem>>, %arg7: memref<16x256xbf16, #tpu.memory_space<vmem>>, %arg8: memref<8x16xbf16, #tpu.memory_space<vmem>>, %arg9: memref<16x8xbf16, #tpu.memory_space<vmem>>, %arg10: memref<8x8xf32, #tpu.memory_space<vmem>>, %arg11: memref<8x4xf32, #tpu.memory_space<vmem>>, %arg12: memref<16x3xf32, #tpu.memory_space<vmem>>, %arg13: memref<2x128xf32, #tpu.memory_space<vmem>>, %arg14: memref<1x256xf32, #tpu.memory_space<vmem>>, %arg15: memref<1x16x256xf32, #tpu.memory_space<vmem>>) attributes {dimension_semantics = [#tpu.dimension_semantics<parallel>, #tpu.dimension_semantics<parallel>], iteration_bounds = array<i64: 1, 1>, scalar_prefetch = 0 : i64, scratch_operands = 0 : i64, tpu.core_type = #tpu.core_type<tc>, window_params = [{transform_indices = @transform_0, window_bounds = array<i64: 1, 16, 256>}, {transform_indices = @transform_1, window_bounds = array<i64: 1, 16, 256>}, {pipeline_mode = #tpu.pipeline_mode<synchronous>, transform_indices = @transform_2, window_bounds = array<i64: 256, 128>}, {pipeline_mode = #tpu.pipeline_mode<synchronous>, transform_indices = @transform_3, window_bounds = array<i64: 128, 256>}, {pipeline_mode = #tpu.pipeline_mode<synchronous>, transform_indices = @transform_4, window_bounds = array<i64: 256, 16>}, {pipeline_mode = #tpu.pipeline_mode<synchronous>, transform_indices = @transform_5, window_bounds = array<i64: 16, 256>}, {pipeline_mode = #tpu.pipeline_mode<synchronous>, transform_indices = @transform_6, window_bounds = array<i64: 8, 16>}, {pipeline_mode = #tpu.pipeline_mode<synchronous>, transform_indices = @transform_7, window_bounds = array<i64: 16, 8>}, {pipeline_mode = #tpu.pipeline_mode<synchronous>, transform_indices = @transform_8, window_bounds = array<i64: 8, 8>}, {pipeline_mode = #tpu.pipeline_mode<synchronous>, transform_indices = @transform_9, window_bounds = array<i64: 8, 4>}, {pipeline_mode = #tpu.pipeline_mode<synchronous>, transform_indices = @transform_10, window_bounds = array<i64: 16, 3>}, {pipeline_mode = #tpu.pipeline_mode<synchronous>, transform_indices = @transform_11, window_bounds = array<i64: 2, 128>}, {pipeline_mode = #tpu.pipeline_mode<synchronous>, transform_indices = @transform_12, window_bounds = array<i64: 1, 256>}, {transform_indices = @transform_13, window_bounds = array<i64: 1, 16, 256>}]} {
    %c0 = arith.constant 0 : index
    %c0_0 = arith.constant 0 : index
    %c0_1 = arith.constant 0 : index
    %0 = vector.load %arg2[%c0, %c0_0, %c0_1] : memref<1x16x256xf32, #tpu.memory_space<vmem>>, vector<1x16x256xf32>
    %1 = vector.shape_cast %0 : vector<1x16x256xf32> to vector<16x256xf32>
    %c0_2 = arith.constant 0 : index
    %c0_3 = arith.constant 0 : index
    %c0_4 = arith.constant 0 : index
    %2 = vector.load %arg3[%c0_2, %c0_3, %c0_4] : memref<1x16x256xf32, #tpu.memory_space<vmem>>, vector<1x16x256xf32>
    %3 = vector.shape_cast %2 : vector<1x16x256xf32> to vector<16x256xf32>
    %4 = arith.addf %1, %3 : vector<16x256xf32>
    %5 = arith.truncf %4 : vector<16x256xf32> to vector<16x256xbf16>
    %c0_5 = arith.constant 0 : index
    %c0_6 = arith.constant 0 : index
    %6 = vector.load %arg4[%c0_5, %c0_6] : memref<256x128xbf16, #tpu.memory_space<vmem>>, vector<256x128xbf16>
    %cst = arith.constant dense<0.000000e+00> : vector<16x128xf32>
    %7 = tpu.matmul %5, %6, %cst {dimension_numbers = #tpu.dot_dimension_numbers<[1], [0], [0], [1], [0, 0, 1, 1], [], []>} : vector<16x256xbf16>, vector<256x128xbf16>, vector<16x128xf32> -> vector<16x128xf32>
    %c0_7 = arith.constant 0 : index
    %c0_8 = arith.constant 0 : index
    %8 = vector.load %arg6[%c0_7, %c0_8] : memref<256x16xbf16, #tpu.memory_space<vmem>>, vector<256x16xbf16>
    %cst_9 = arith.constant dense<0.000000e+00> : vector<16x16xf32>
    %9 = tpu.matmul %5, %8, %cst_9 {dimension_numbers = #tpu.dot_dimension_numbers<[1], [0], [0], [1], [0, 0, 1, 1], [], []>} : vector<16x256xbf16>, vector<256x16xbf16>, vector<16x16xf32> -> vector<16x16xf32>
    %c0_10 = arith.constant 0 : index
    %c0_11 = arith.constant 0 : index
    %10 = vector.load %arg11[%c0_10, %c0_11] : memref<8x4xf32, #tpu.memory_space<vmem>>, vector<8x4xf32>
    %c0_12 = arith.constant 0 : index
    %c0_13 = arith.constant 0 : index
    %11 = vector.load %arg8[%c0_12, %c0_13] : memref<8x16xbf16, #tpu.memory_space<vmem>>, vector<8x16xbf16>
    %12 = arith.truncf %9 : vector<16x16xf32> to vector<16x16xbf16>
    %cst_14 = arith.constant dense<0.000000e+00> : vector<8x16xf32>
    %13 = tpu.matmul %11, %12, %cst_14 {dimension_numbers = #tpu.dot_dimension_numbers<[1], [0], [0], [1], [0, 0, 1, 1], [], []>} : vector<8x16xbf16>, vector<16x16xbf16>, vector<8x16xf32> -> vector<8x16xf32>
    %14 = vector.extract_strided_slice %10 {offsets = [0, 0], sizes = [8, 1], strides = [1, 1]} : vector<8x4xf32> to vector<8x1xf32>
    %15 = vector.broadcast %14 : vector<8x1xf32> to vector<8x16xf32>
    %16 = arith.addf %13, %15 : vector<8x16xf32>
    %c0_15 = arith.constant 0 : index
    %c0_16 = arith.constant 0 : index
    %17 = vector.load %arg10[%c0_15, %c0_16] : memref<8x8xf32, #tpu.memory_space<vmem>>, vector<8x8xf32>
    %cst_17 = arith.constant dense<0.000000e+00> : vector<8x16xf32>
    %18 = tpu.matmul %17, %16, %cst_17 {dimension_numbers = #tpu.dot_dimension_numbers<[1], [0], [0], [1], [0, 0, 1, 1], [], []>} : vector<8x8xf32>, vector<8x16xf32>, vector<8x16xf32> -> vector<8x16xf32>
    %19 = arith.subf %16, %18 : vector<8x16xf32>
    %20 = arith.mulf %19, %19 : vector<8x16xf32>
    %cst_18 = arith.constant dense<0.000000e+00> : vector<8x16xf32>
    %21 = tpu.matmul %17, %20, %cst_18 {dimension_numbers = #tpu.dot_dimension_numbers<[1], [0], [0], [1], [0, 0, 1, 1], [], []>} : vector<8x8xf32>, vector<8x16xf32>, vector<8x16xf32> -> vector<8x16xf32>
    %22 = arith.subf %16, %18 : vector<8x16xf32>
    %cst_19 = arith.constant 9.99999974E-6 : f32
    %23 = vector.broadcast %cst_19 : f32 to vector<8x16xf32>
    %24 = arith.addf %21, %23 : vector<8x16xf32>
    %25 = math.rsqrt %24 : vector<8x16xf32>
    %26 = arith.mulf %22, %25 : vector<8x16xf32>
    %27 = vector.extract_strided_slice %10 {offsets = [0, 1], sizes = [8, 1], strides = [1, 1]} : vector<8x4xf32> to vector<8x1xf32>
    %28 = vector.broadcast %27 : vector<8x1xf32> to vector<8x16xf32>
    %29 = arith.mulf %26, %28 : vector<8x16xf32>
    %30 = vector.extract_strided_slice %10 {offsets = [0, 2], sizes = [8, 1], strides = [1, 1]} : vector<8x4xf32> to vector<8x1xf32>
    %31 = vector.broadcast %30 : vector<8x1xf32> to vector<8x16xf32>
    %32 = arith.addf %29, %31 : vector<8x16xf32>
    %cst_20 = arith.constant 0.000000e+00 : f32
    %33 = vector.broadcast %cst_20 : f32 to vector<8x16xf32>
    %34 = arith.cmpf oge, %32, %33 : vector<8x16xf32>
    %35 = vector.extract_strided_slice %10 {offsets = [0, 3], sizes = [8, 1], strides = [1, 1]} : vector<8x4xf32> to vector<8x1xf32>
    %36 = vector.broadcast %35 : vector<8x1xf32> to vector<8x16xf32>
    %37 = arith.mulf %36, %32 : vector<8x16xf32>
    %38 = arith.select %34, %32, %37 : vector<8x16xi1>, vector<8x16xf32>
    %c0_21 = arith.constant 0 : index
    %c0_22 = arith.constant 0 : index
    %39 = vector.load %arg9[%c0_21, %c0_22] : memref<16x8xbf16, #tpu.memory_space<vmem>>, vector<16x8xbf16>
    %40 = arith.truncf %38 : vector<8x16xf32> to vector<8x16xbf16>
    %cst_23 = arith.constant dense<0.000000e+00> : vector<16x16xf32>
    %41 = tpu.matmul %39, %40, %cst_23 {dimension_numbers = #tpu.dot_dimension_numbers<[1], [0], [0], [1], [0, 0, 1, 1], [], []>} : vector<16x8xbf16>, vector<8x16xbf16>, vector<16x16xf32> -> vector<16x16xf32>
    %c0_24 = arith.constant 0 : index
    %c2 = arith.constant 2 : index
    %42 = vector.load %arg12[%c0_24, %c2] : memref<16x3xf32, #tpu.memory_space<vmem>>, vector<16x1xf32>
    %43 = vector.broadcast %42 : vector<16x1xf32> to vector<16x16xf32>
    %44 = arith.addf %41, %43 : vector<16x16xf32>
    %45 = arith.truncf %44 : vector<16x16xf32> to vector<16x16xbf16>
    %c0_25 = arith.constant 0 : index
    %c0_26 = arith.constant 0 : index
    %46 = vector.load %arg7[%c0_25, %c0_26] : memref<16x256xbf16, #tpu.memory_space<vmem>>, vector<16x256xbf16>
    %cst_27 = arith.constant dense<0.000000e+00> : vector<16x256xf32>
    %47 = tpu.matmul %45, %46, %cst_27 {dimension_numbers = #tpu.dot_dimension_numbers<[1], [0], [0], [1], [0, 0, 1, 1], [], []>} : vector<16x16xbf16>, vector<16x256xbf16>, vector<16x256xf32> -> vector<16x256xf32>
    %c0_28 = arith.constant 0 : index
    %c0_29 = arith.constant 0 : index
    %48 = vector.load %arg13[%c0_28, %c0_29] : memref<2x128xf32, #tpu.memory_space<vmem>>, vector<2x128xf32>
    %c0_30 = arith.constant 0 : index
    %c0_31 = arith.constant 0 : index
    %49 = vector.load %arg12[%c0_30, %c0_31] : memref<16x3xf32, #tpu.memory_space<vmem>>, vector<16x3xf32>
    %50 = vector.extract_strided_slice %48 {offsets = [0, 0], sizes = [1, 128], strides = [1, 1]} : vector<2x128xf32> to vector<1x128xf32>
    %51 = vector.broadcast %50 : vector<1x128xf32> to vector<16x128xf32>
    %52 = arith.addf %7, %51 : vector<16x128xf32>
    %53 = vector.shape_cast %52 : vector<16x128xf32> to vector<2x8x128xf32>
    %cst_32 = arith.constant dense<0.000000e+00> : vector<2x128xf32>
    %54 = vector.multi_reduction <add>, %53, %cst_32 [1] : vector<2x8x128xf32> to vector<2x128xf32>
    %55 = vector.shape_cast %54 : vector<2x128xf32> to vector<2x1x128xf32>
    %cst_33 = arith.constant 8.000000e+00 : f32
    %56 = vector.broadcast %cst_33 : f32 to vector<2x1x128xf32>
    %57 = arith.divf %55, %56 : vector<2x1x128xf32>
    %58 = vector.broadcast %57 : vector<2x1x128xf32> to vector<2x8x128xf32>
    %59 = arith.subf %53, %58 : vector<2x8x128xf32>
    %60 = arith.mulf %59, %59 : vector<2x8x128xf32>
    %cst_34 = arith.constant dense<0.000000e+00> : vector<2x128xf32>
    %61 = vector.multi_reduction <add>, %60, %cst_34 [1] : vector<2x8x128xf32> to vector<2x128xf32>
    %62 = vector.shape_cast %61 : vector<2x128xf32> to vector<2x1x128xf32>
    %cst_35 = arith.constant 8.000000e+00 : f32
    %63 = vector.broadcast %cst_35 : f32 to vector<2x1x128xf32>
    %64 = arith.divf %62, %63 : vector<2x1x128xf32>
    %65 = vector.broadcast %57 : vector<2x1x128xf32> to vector<2x8x128xf32>
    %66 = arith.subf %53, %65 : vector<2x8x128xf32>
    %cst_36 = arith.constant 9.99999974E-6 : f32
    %67 = vector.broadcast %cst_36 : f32 to vector<2x1x128xf32>
    %68 = arith.addf %64, %67 : vector<2x1x128xf32>
    %69 = math.rsqrt %68 : vector<2x1x128xf32>
    %70 = vector.broadcast %69 : vector<2x1x128xf32> to vector<2x8x128xf32>
    %71 = arith.mulf %66, %70 : vector<2x8x128xf32>
    %72 = vector.shape_cast %71 : vector<2x8x128xf32> to vector<16x128xf32>
    %73 = vector.extract_strided_slice %49 {offsets = [0, 0], sizes = [16, 1], strides = [1, 1]} : vector<16x3xf32> to vector<16x1xf32>
    %74 = vector.broadcast %73 : vector<16x1xf32> to vector<16x128xf32>
    %75 = arith.mulf %72, %74 : vector<16x128xf32>
    %76 = vector.extract_strided_slice %49 {offsets = [0, 1], sizes = [16, 1], strides = [1, 1]} : vector<16x3xf32> to vector<16x1xf32>
    %77 = vector.broadcast %76 : vector<16x1xf32> to vector<16x128xf32>
    %78 = arith.addf %75, %77 : vector<16x128xf32>
    %cst_37 = arith.constant 0.000000e+00 : f32
    %79 = vector.broadcast %cst_37 : f32 to vector<16x128xf32>
    %80 = arith.cmpf oge, %78, %79 : vector<16x128xf32>
    %81 = vector.extract_strided_slice %48 {offsets = [1, 0], sizes = [1, 128], strides = [1, 1]} : vector<2x128xf32> to vector<1x128xf32>
    %82 = vector.broadcast %81 : vector<1x128xf32> to vector<16x128xf32>
    %83 = arith.mulf %82, %78 : vector<16x128xf32>
    %84 = arith.select %80, %78, %83 : vector<16x128xi1>, vector<16x128xf32>
    %85 = arith.truncf %84 : vector<16x128xf32> to vector<16x128xbf16>
    %c0_38 = arith.constant 0 : index
    %c0_39 = arith.constant 0 : index
    %86 = vector.load %arg5[%c0_38, %c0_39] : memref<128x256xbf16, #tpu.memory_space<vmem>>, vector<128x256xbf16>
    %cst_40 = arith.constant dense<0.000000e+00> : vector<16x256xf32>
    %87 = tpu.matmul %85, %86, %cst_40 {dimension_numbers = #tpu.dot_dimension_numbers<[1], [0], [0], [1], [0, 0, 1, 1], [], []>} : vector<16x128xbf16>, vector<128x256xbf16>, vector<16x256xf32> -> vector<16x256xf32>
    %c0_41 = arith.constant 0 : index
    %c0_42 = arith.constant 0 : index
    %88 = vector.load %arg14[%c0_41, %c0_42] : memref<1x256xf32, #tpu.memory_space<vmem>>, vector<1x256xf32>
    %89 = vector.broadcast %88 : vector<1x256xf32> to vector<16x256xf32>
    %90 = arith.addf %87, %89 : vector<16x256xf32>
    %91 = arith.addf %90, %47 : vector<16x256xf32>
    %92 = arith.negf %91 : vector<16x256xf32>
    %93 = math.exp %92 : vector<16x256xf32>
    %cst_43 = arith.constant 1.000000e+00 : f32
    %94 = vector.broadcast %cst_43 : f32 to vector<16x256xf32>
    %95 = arith.addf %94, %93 : vector<16x256xf32>
    %96 = arith.divf %94, %95 : vector<16x256xf32>
    %97 = arith.subf %1, %3 : vector<16x256xf32>
    %98 = arith.mulf %96, %97 : vector<16x256xf32>
    %99 = arith.addf %3, %98 : vector<16x256xf32>
    %c0_44 = arith.constant 0 : index
    %c0_45 = arith.constant 0 : index
    %c0_46 = arith.constant 0 : index
    %100 = vector.load %arg15[%c0_44, %c0_45, %c0_46] : memref<1x16x256xf32, #tpu.memory_space<vmem>>, vector<1x16x256xf32>
    %101 = vector.shape_cast %100 : vector<1x16x256xf32> to vector<16x256xf32>
    %102 = vector.shape_cast %99 : vector<16x256xf32> to vector<1x16x256xf32>
    tpu.vector_store %arg15[%c0_44, %c0_45, %c0_46], %102 {strides = array<i32>} : memref<1x16x256xf32, #tpu.memory_space<vmem>>, vector<1x16x256xf32>,
    return
  }
  func.func @transform_0(%arg0: i32, %arg1: i32) -> (i32, i32, i32) {
    %c0_i32 = arith.constant 0 : i32
    %c0_i32_0 = arith.constant 0 : i32
    return %arg0, %c0_i32, %arg1 : i32, i32, i32
  }
  func.func @transform_1(%arg0: i32, %arg1: i32) -> (i32, i32, i32) {
    %c0_i32 = arith.constant 0 : i32
    %c0_i32_0 = arith.constant 0 : i32
    return %arg0, %c0_i32, %arg1 : i32, i32, i32
  }
  func.func @transform_2(%arg0: i32, %arg1: i32) -> (i32, i32) {
    %c0_i32 = arith.constant 0 : i32
    %c0_i32_0 = arith.constant 0 : i32
    %c0_i32_1 = arith.constant 0 : i32
    return %c0_i32, %c0_i32_0 : i32, i32
  }
  func.func @transform_3(%arg0: i32, %arg1: i32) -> (i32, i32) {
    %c0_i32 = arith.constant 0 : i32
    %c0_i32_0 = arith.constant 0 : i32
    %c0_i32_1 = arith.constant 0 : i32
    return %c0_i32, %c0_i32_0 : i32, i32
  }
  func.func @transform_4(%arg0: i32, %arg1: i32) -> (i32, i32) {
    %c0_i32 = arith.constant 0 : i32
    %c0_i32_0 = arith.constant 0 : i32
    %c0_i32_1 = arith.constant 0 : i32
    return %c0_i32, %c0_i32_0 : i32, i32
  }
  func.func @transform_5(%arg0: i32, %arg1: i32) -> (i32, i32) {
    %c0_i32 = arith.constant 0 : i32
    %c0_i32_0 = arith.constant 0 : i32
    %c0_i32_1 = arith.constant 0 : i32
    return %c0_i32, %c0_i32_0 : i32, i32
  }
  func.func @transform_6(%arg0: i32, %arg1: i32) -> (i32, i32) {
    %c0_i32 = arith.constant 0 : i32
    %c0_i32_0 = arith.constant 0 : i32
    %c0_i32_1 = arith.constant 0 : i32
    return %c0_i32, %c0_i32_0 : i32, i32
  }
  func.func @transform_7(%arg0: i32, %arg1: i32) -> (i32, i32) {
    %c0_i32 = arith.constant 0 : i32
    %c0_i32_0 = arith.constant 0 : i32
    %c0_i32_1 = arith.constant 0 : i32
    return %c0_i32, %c0_i32_0 : i32, i32
  }
  func.func @transform_8(%arg0: i32, %arg1: i32) -> (i32, i32) {
    %c0_i32 = arith.constant 0 : i32
    %c0_i32_0 = arith.constant 0 : i32
    %c0_i32_1 = arith.constant 0 : i32
    return %c0_i32, %c0_i32_0 : i32, i32
  }
  func.func @transform_9(%arg0: i32, %arg1: i32) -> (i32, i32) {
    %c0_i32 = arith.constant 0 : i32
    %c0_i32_0 = arith.constant 0 : i32
    %c0_i32_1 = arith.constant 0 : i32
    return %c0_i32, %c0_i32_0 : i32, i32
  }
  func.func @transform_10(%arg0: i32, %arg1: i32) -> (i32, i32) {
    %c0_i32 = arith.constant 0 : i32
    %c0_i32_0 = arith.constant 0 : i32
    %c0_i32_1 = arith.constant 0 : i32
    return %c0_i32, %c0_i32_0 : i32, i32
  }
  func.func @transform_11(%arg0: i32, %arg1: i32) -> (i32, i32) {
    %c0_i32 = arith.constant 0 : i32
    %c0_i32_0 = arith.constant 0 : i32
    %c0_i32_1 = arith.constant 0 : i32
    return %c0_i32, %c0_i32_0 : i32, i32
  }
  func.func @transform_12(%arg0: i32, %arg1: i32) -> (i32, i32) {
    %c0_i32 = arith.constant 0 : i32
    %c0_i32_0 = arith.constant 0 : i32
    %c0_i32_1 = arith.constant 0 : i32
    return %c0_i32, %c0_i32_0 : i32, i32
  }
  func.func @transform_13(%arg0: i32, %arg1: i32) -> (i32, i32, i32) {
    %c0_i32 = arith.constant 0 : i32
    %c0_i32_0 = arith.constant 0 : i32
    return %arg0, %c0_i32, %arg1 : i32, i32, i32
  }
}

</mosaic_0001>

<llo_original>
// kernel: tpu_custom_call.1
$region0: #{tpu_custom_call.1}
  #allocation0 [shape = 'u32[]', space=smem, size = 0x4, offset = 0x4, fixed_abs, tag = 'smem constant byte address 0x4 - core index']
  #allocation1 [shape = 'u32[144,128]{1,0:T(1,128)}', space=vmem, size = 0x12000, scoped, tag = 'internal scratch']
  %s0 = inlined_call_operand.vmem [shape: f32[1,16,256], index: 0, kind: input, shape index: {}]
  %s1 = inlined_call_operand.hbm [shape: f32[1,16,256], index: 1, kind: input, shape index: {}]
  %s2 = inlined_call_operand.vmem [shape: bf16[256,128], index: 2, kind: input, shape index: {}]
  %s3 = inlined_call_operand.hbm [shape: bf16[128,256], index: 3, kind: input, shape index: {}]
  %s4 = inlined_call_operand.vmem [shape: bf16[256,16], index: 4, kind: input, shape index: {}]
  %s5 = inlined_call_operand.vmem [shape: bf16[16,256], index: 5, kind: input, shape index: {}]
  %s6 = inlined_call_operand.hbm [shape: bf16[8,16], index: 6, kind: input, shape index: {}]
  %s7 = inlined_call_operand.vmem [shape: bf16[16,8], index: 7, kind: input, shape index: {}]
  %s8 = inlined_call_operand.vmem [shape: f32[8,8], index: 8, kind: input, shape index: {}]
  %s9 = inlined_call_operand.vmem [shape: f32[8,4], index: 9, kind: input, shape index: {}]
  %s10 = inlined_call_operand.vmem [shape: f32[16,3], index: 10, kind: input, shape index: {}]
  %s11 = inlined_call_operand.vmem [shape: f32[2,128], index: 11, kind: input, shape index: {}]
  %s12 = inlined_call_operand.vmem [shape: f32[1,256], index: 12, kind: input, shape index: {}]
  %s13 = inlined_call_operand.hbm [shape: f32[1,16,256], index: 13, kind: output, shape index: {}]
  %s14 = sld [smem:[#allocation0]]
  $region74: #{tpu_custom_call.1} parent=0
    _
  %s16 = ssub.s32 1, %s14
  %s17 = scalar_select 0, %s16, %s14
  $region1: #{tpu_custom_call.1} parent=0
    #allocation2 [shape = 'u8[16384]{0}', space=vmem, size = 0x4000, scoped, tag = 'input window, operand 1, single buffered']
    #allocation3 [shape = 's32[1]{0}', space=sflag, size = 0x4, scoped, tag = 'scoped memory for tpu_custom_call.1']
    #allocation4 [shape = 's32[1]{0}', space=sflag, size = 0x4, scoped, tag = 'scoped memory for tpu_custom_call.1']
    #allocation5 [shape = 'u8[65536]{0}', space=vmem, size = 0x10000, scoped, tag = 'input window, operand 3, single buffered']
    #allocation6 [shape = 's32[1]{0}', space=sflag, size = 0x4, scoped, tag = 'scoped memory for tpu_custom_call.1']
    #allocation7 [shape = 'u8[2048]{0}', space=vmem, size = 0x800, scoped, tag = 'input window, operand 6, single buffered']
    #allocation8 [shape = 'u8[16384]{0}', space=vmem, size = 0x4000, scoped, tag = 'output window, operand 0, single buffered']
    %18 = vsyncpa [#allocation3], 0
    %19 = vsyncpa [#allocation6], 0
    %20 = vsyncpa [#allocation4], 0
    // Predicated region
    $region2: #{tpu_custom_call.1} parent=1 // pred_check
      _
    $region3: #{tpu_custom_call.1} parent=1 // pred_check_branch
      %22 = sbr.rel (0) target = $region5
    $region4: #{tpu_custom_call.1} parent=1 // pred_region
      _
    $region5: #{tpu_custom_call.1} parent=1 // pred_fallthru
      _
    // Predicated region
    $region6: #{tpu_custom_call.1} parent=1 // pred_check
      _
    $region7: #{tpu_custom_call.1} parent=1 // pred_check_branch
      %24 = sbr.rel (0) target = $region9
    $region8: #{tpu_custom_call.1} parent=1 // pred_region
      %s26 = ssub.s32 512, 512
      %27 = vsyncadd [#allocation3], %s26
      %s28 = sshll.u32 [#allocation2], 4
      %s29 = int_to_ptr.vmem [resolvable:$true] %s28
      %34 = dma.hbm_to_vmem [thread:$0]  %s1, 512, %s29, [#allocation3], 256, 256, 16
    $region9: #{tpu_custom_call.1} parent=1 // pred_fallthru
      _
    // Predicated region
    $region10: #{tpu_custom_call.1} parent=1 // pred_check
      _
    $region11: #{tpu_custom_call.1} parent=1 // pred_check_branch
      %36 = sbr.rel (0) target = $region13
    $region12: #{tpu_custom_call.1} parent=1 // pred_region
      _
    $region13: #{tpu_custom_call.1} parent=1 // pred_fallthru
      _
    // Predicated region
    $region14: #{tpu_custom_call.1} parent=1 // pred_check
      _
    $region15: #{tpu_custom_call.1} parent=1 // pred_check_branch
      %38 = sbr.rel (0) target = $region17
    $region16: #{tpu_custom_call.1} parent=1 // pred_region
      %s40 = ssub.s32 2048, 2048
      %41 = vsyncadd [#allocation6], %s40
      %s42 = sshll.u32 [#allocation5], 4
      %s43 = int_to_ptr.vmem [resolvable:$true] %s42
      %48 = dma.hbm_to_vmem [thread:$0]  %s3, 2048, %s43, [#allocation6], 128, 128, 8
    $region17: #{tpu_custom_call.1} parent=1 // pred_fallthru
      _
    // Predicated region
    $region18: #{tpu_custom_call.1} parent=1 // pred_check
      _
    $region19: #{tpu_custom_call.1} parent=1 // pred_check_branch
      %50 = sbr.rel (0) target = $region21
    $region20: #{tpu_custom_call.1} parent=1 // pred_region
      _
    $region21: #{tpu_custom_call.1} parent=1 // pred_fallthru
      _
    // Predicated region
    $region22: #{tpu_custom_call.1} parent=1 // pred_check
      _
    $region23: #{tpu_custom_call.1} parent=1 // pred_check_branch
      %52 = sbr.rel (0) target = $region25
    $region24: #{tpu_custom_call.1} parent=1 // pred_region
      _
    $region25: #{tpu_custom_call.1} parent=1 // pred_fallthru
      _
    // Predicated region
    $region26: #{tpu_custom_call.1} parent=1 // pred_check
      _
    $region27: #{tpu_custom_call.1} parent=1 // pred_check_branch
      %54 = sbr.rel (0) target = $region29
    $region28: #{tpu_custom_call.1} parent=1 // pred_region
      %s56 = ssub.s32 64, 64
      %57 = vsyncadd [#allocation6], %s56
      %s59 = sshll.u32 [#allocation7], 4
      %s60 = int_to_ptr.vmem [resolvable:$true] %s59
      %62 = dma.hbm_to_vmem [thread:$0]  %s6, 64, %s60, [#allocation6]
    $region29: #{tpu_custom_call.1} parent=1 // pred_fallthru
      _
    // Predicated region
    $region30: #{tpu_custom_call.1} parent=1 // pred_check
      _
    $region31: #{tpu_custom_call.1} parent=1 // pred_check_branch
      %64 = sbr.rel (0) target = $region33
    $region32: #{tpu_custom_call.1} parent=1 // pred_region
      _
    $region33: #{tpu_custom_call.1} parent=1 // pred_fallthru
      _
    // Predicated region
    $region34: #{tpu_custom_call.1} parent=1 // pred_check
      _
    $region35: #{tpu_custom_call.1} parent=1 // pred_check_branch
      %66 = sbr.rel (0) target = $region37
    $region36: #{tpu_custom_call.1} parent=1 // pred_region
      _
    $region37: #{tpu_custom_call.1} parent=1 // pred_fallthru
      _
    // Predicated region
    $region38: #{tpu_custom_call.1} parent=1 // pred_check
      _
    $region39: #{tpu_custom_call.1} parent=1 // pred_check_branch
      %68 = sbr.rel (0) target = $region41
    $region40: #{tpu_custom_call.1} parent=1 // pred_region
      _
    $region41: #{tpu_custom_call.1} parent=1 // pred_fallthru
      _
    // Predicated region
    $region42: #{tpu_custom_call.1} parent=1 // pred_check
      _
    $region43: #{tpu_custom_call.1} parent=1 // pred_check_branch
      %70 = sbr.rel (0) target = $region45
    $region44: #{tpu_custom_call.1} parent=1 // pred_region
      _
    $region45: #{tpu_custom_call.1} parent=1 // pred_fallthru
      _
    // Predicated region
    $region46: #{tpu_custom_call.1} parent=1 // pred_check
      _
    $region47: #{tpu_custom_call.1} parent=1 // pred_check_branch
      %72 = sbr.rel (0) target = $region49
    $region48: #{tpu_custom_call.1} parent=1 // pred_region
      _
    $region49: #{tpu_custom_call.1} parent=1 // pred_fallthru
      _
    // Predicated region
    $region50: #{tpu_custom_call.1} parent=1 // pred_check
      _
    $region51: #{tpu_custom_call.1} parent=1 // pred_check_branch
      %74 = sbr.rel (0) target = $region53
    $region52: #{tpu_custom_call.1} parent=1 // pred_region
      _
    $region53: #{tpu_custom_call.1} parent=1 // pred_fallthru
      _
    // Predicated region
    $region54: #{tpu_custom_call.1} parent=1 // pred_check
      _
    $region55: #{tpu_custom_call.1} parent=1 // pred_check_branch
      %76 = sbr.rel (0) target = $region57
    $region56: #{tpu_custom_call.1} parent=1 // pred_region
      %77 = dma.done [#allocation3], 512
    $region57: #{tpu_custom_call.1} parent=1 // pred_fallthru
      _
    // Predicated region
    $region58: #{tpu_custom_call.1} parent=1 // pred_check
      _
    $region59: #{tpu_custom_call.1} parent=1 // pred_check_branch
      %79 = sbr.rel (0) target = $region61
    $region60: #{tpu_custom_call.1} parent=1 // pred_region
      %80 = dma.done [#allocation6], 2048
    $region61: #{tpu_custom_call.1} parent=1 // pred_fallthru
      _
    // Predicated region
    $region62: #{tpu_custom_call.1} parent=1 // pred_check
      _
    $region63: #{tpu_custom_call.1} parent=1 // pred_check_branch
      %82 = sbr.rel (0) target = $region65
    $region64: #{tpu_custom_call.1} parent=1 // pred_region
      %83 = dma.done [#allocation6], 64
    $region65: #{tpu_custom_call.1} parent=1 // pred_fallthru
      _
    %v85 = vld [vmem:[%s0] sm:$0xff]
    %v86 = vld [vmem:[%s0 + $0x8] sm:$0xff]
    %v87 = vld [vmem:[%s0 + $0x10] sm:$0xff]
    %v88 = vld [vmem:[%s0 + $0x18] sm:$0xff]
    %v89 = vld [vmem:[#allocation2] sm:$0xff]
    %v90 = vld [vmem:[#allocation2 + $0x8] sm:$0xff]
    %v91 = vld [vmem:[#allocation2 + $0x10] sm:$0xff]
    %v92 = vld [vmem:[#allocation2 + $0x18] sm:$0xff]
    %v93 = vadd.f32 %v85, %v89
    %v94 = vadd.f32 %v86, %v90
    %v95 = vadd.f32 %v87, %v91
    %v96 = vadd.f32 %v88, %v92
    %v97 = vpack.c.bf16 %v95, %v93
    %v98 = vpack.c.bf16 %v96, %v94
    %v99 = vld [vmem:[%s2] sm:$0xf]
    %v100 = vld [vmem:[%s2 + $0x4] sm:$0xf]
    %v101 = vld [vmem:[%s2 + $0x8] sm:$0xf]
    %v102 = vld [vmem:[%s2 + $0xc] sm:$0xf]
    %v103 = vld [vmem:[%s2 + $0x10] sm:$0xf]
    %v104 = vld [vmem:[%s2 + $0x14] sm:$0xf]
    %v105 = vld [vmem:[%s2 + $0x18] sm:$0xf]
    %v106 = vld [vmem:[%s2 + $0x1c] sm:$0xf]
    %v107 = vld [vmem:[%s2 + $0x20] sm:$0xf]
    %v108 = vld [vmem:[%s2 + $0x24] sm:$0xf]
    %v109 = vld [vmem:[%s2 + $0x28] sm:$0xf]
    %v110 = vld [vmem:[%s2 + $0x2c] sm:$0xf]
    %v111 = vld [vmem:[%s2 + $0x30] sm:$0xf]
    %v112 = vld [vmem:[%s2 + $0x34] sm:$0xf]
    %v113 = vld [vmem:[%s2 + $0x38] sm:$0xf]
    %v114 = vld [vmem:[%s2 + $0x3c] sm:$0xf]
    %v115 = vld [vmem:[%s2 + $0x40] sm:$0xf]
    %v116 = vld [vmem:[%s2 + $0x44] sm:$0xf]
    %v117 = vld [vmem:[%s2 + $0x48] sm:$0xf]
    %v118 = vld [vmem:[%s2 + $0x4c] sm:$0xf]
    %v119 = vld [vmem:[%s2 + $0x50] sm:$0xf]
    %v120 = vld [vmem:[%s2 + $0x54] sm:$0xf]
    %v121 = vld [vmem:[%s2 + $0x58] sm:$0xf]
    %v122 = vld [vmem:[%s2 + $0x5c] sm:$0xf]
    %v123 = vld [vmem:[%s2 + $0x60] sm:$0xf]
    %v124 = vld [vmem:[%s2 + $0x64] sm:$0xf]
    %v125 = vld [vmem:[%s2 + $0x68] sm:$0xf]
    %v126 = vld [vmem:[%s2 + $0x6c] sm:$0xf]
    %v127 = vld [vmem:[%s2 + $0x70] sm:$0xf]
    %v128 = vld [vmem:[%s2 + $0x74] sm:$0xf]
    %v129 = vld [vmem:[%s2 + $0x78] sm:$0xf]
    %v130 = vld [vmem:[%s2 + $0x7c] sm:$0xf]
    %v131 = vld [vmem:[%s4] sm:$0xf]
    %v132 = vld [vmem:[%s4 + $0x4] sm:$0xf]
    %v133 = vld [vmem:[%s4 + $0x8] sm:$0xf]
    %v134 = vld [vmem:[%s4 + $0xc] sm:$0xf]
    %v135 = vld [vmem:[%s4 + $0x10] sm:$0xf]
    %v136 = vld [vmem:[%s4 + $0x14] sm:$0xf]
    %v137 = vld [vmem:[%s4 + $0x18] sm:$0xf]
    %v138 = vld [vmem:[%s4 + $0x1c] sm:$0xf]
    %v139 = vld [vmem:[%s4 + $0x20] sm:$0xf]
    %v140 = vld [vmem:[%s4 + $0x24] sm:$0xf]
    %v141 = vld [vmem:[%s4 + $0x28] sm:$0xf]
    %v142 = vld [vmem:[%s4 + $0x2c] sm:$0xf]
    %v143 = vld [vmem:[%s4 + $0x30] sm:$0xf]
    %v144 = vld [vmem:[%s4 + $0x34] sm:$0xf]
    %v145 = vld [vmem:[%s4 + $0x38] sm:$0xf]
    %v146 = vld [vmem:[%s4 + $0x3c] sm:$0xf]
    %v147 = vld [vmem:[%s4 + $0x40] sm:$0xf]
    %v148 = vld [vmem:[%s4 + $0x44] sm:$0xf]
    %v149 = vld [vmem:[%s4 + $0x48] sm:$0xf]
    %v150 = vld [vmem:[%s4 + $0x4c] sm:$0xf]
    %v151 = vld [vmem:[%s4 + $0x50] sm:$0xf]
    %v152 = vld [vmem:[%s4 + $0x54] sm:$0xf]
    %v153 = vld [vmem:[%s4 + $0x58] sm:$0xf]
    %v154 = vld [vmem:[%s4 + $0x5c] sm:$0xf]
    %v155 = vld [vmem:[%s4 + $0x60] sm:$0xf]
    %v156 = vld [vmem:[%s4 + $0x64] sm:$0xf]
    %v157 = vld [vmem:[%s4 + $0x68] sm:$0xf]
    %v158 = vld [vmem:[%s4 + $0x6c] sm:$0xf]
    %v159 = vld [vmem:[%s4 + $0x70] sm:$0xf]
    %v160 = vld [vmem:[%s4 + $0x74] sm:$0xf]
    %v161 = vld [vmem:[%s4 + $0x78] sm:$0xf]
    %v162 = vld [vmem:[%s4 + $0x7c] sm:$0xf]
    %v195 = vunpack.c.l.b16 %v131
    %v196 = vunpack.c.l.b16 %v132
    %v197 = vunpack.c.l.b16 %v133
    %v198 = vunpack.c.l.b16 %v134
    %v199 = vunpack.c.l.b16 %v135
    %v200 = vunpack.c.l.b16 %v136
    %v201 = vunpack.c.l.b16 %v137
    %v202 = vunpack.c.l.b16 %v138
    %v203 = vunpack.c.l.b16 %v139
    %v204 = vunpack.c.l.b16 %v140
    %v205 = vunpack.c.l.b16 %v141
    %v206 = vunpack.c.l.b16 %v142
    %v207 = vunpack.c.l.b16 %v143
    %v208 = vunpack.c.l.b16 %v144
    %v209 = vunpack.c.l.b16 %v145
    %v210 = vunpack.c.l.b16 %v146
    %v211 = vunpack.c.l.b16 %v147
    %v212 = vunpack.c.l.b16 %v148
    %v213 = vunpack.c.l.b16 %v149
    %v214 = vunpack.c.l.b16 %v150
    %v215 = vunpack.c.l.b16 %v151
    %v216 = vunpack.c.l.b16 %v152
    %v217 = vunpack.c.l.b16 %v153
    %v218 = vunpack.c.l.b16 %v154
    %v219 = vunpack.c.l.b16 %v155
    %v220 = vunpack.c.l.b16 %v156
    %v221 = vunpack.c.l.b16 %v157
    %v222 = vunpack.c.l.b16 %v158
    %v223 = vunpack.c.l.b16 %v159
    %v224 = vunpack.c.l.b16 %v160
    %v225 = vunpack.c.l.b16 %v161
    %v226 = vunpack.c.l.b16 %v162
    %v227 = vpack.c.b16 %v196, %v195
    %v228 = vpack.c.b16 %v198, %v197
    %v229 = vpack.c.b16 %v200, %v199
    %v230 = vpack.c.b16 %v202, %v201
    %v231 = vpack.c.b16 %v204, %v203
    %v232 = vpack.c.b16 %v206, %v205
    %v233 = vpack.c.b16 %v208, %v207
    %v234 = vpack.c.b16 %v210, %v209
    %v235 = vpack.c.b16 %v212, %v211
    %v236 = vpack.c.b16 %v214, %v213
    %v237 = vpack.c.b16 %v216, %v215
    %v238 = vpack.c.b16 %v218, %v217
    %v239 = vpack.c.b16 %v220, %v219
    %v240 = vpack.c.b16 %v222, %v221
    %v241 = vpack.c.b16 %v224, %v223
    %v242 = vpack.c.b16 %v226, %v225
    %259 = vmatprep.subr.bf16.mxu0 0
    %260 = vmatpush1.bf16.msra.mxu0 %v234
    %261 = vmatprep.subr.bf16.mxu0 0
    %262 = vmatpush1.bf16.msra.mxu0 %v233
    %263 = vmatprep.subr.bf16.mxu0 0
    %264 = vmatpush1.bf16.msra.mxu0 %v232
    %265 = vmatprep.subr.bf16.mxu0 0
    %266 = vmatpush1.bf16.msra.mxu0 %v231
    %267 = vmatprep.subr.bf16.mxu0 0
    %268 = vmatpush1.bf16.msra.mxu0 %v230
    %269 = vmatprep.subr.bf16.mxu0 0
    %270 = vmatpush1.bf16.msra.mxu0 %v229
    %271 = vmatprep.subr.bf16.mxu0 0
    %272 = vmatpush1.bf16.msra.mxu0 %v228
    %273 = vmatprep.subr.bf16.mxu0 0
    %274 = vmatpush1.bf16.msra.mxu0 %v227
    %275 = vmatprep.subr.bf16.mxu0 0
    %276 = vmatpush2.bf16.msra.mxu0 %v242
    %277 = vmatprep.subr.bf16.mxu0 0
    %278 = vmatpush2.bf16.msra.mxu0 %v241
    %279 = vmatprep.subr.bf16.mxu0 0
    %280 = vmatpush2.bf16.msra.mxu0 %v240
    %281 = vmatprep.subr.bf16.mxu0 0
    %282 = vmatpush2.bf16.msra.mxu0 %v239
    %283 = vmatprep.subr.bf16.mxu0 0
    %284 = vmatpush2.bf16.msra.mxu0 %v238
    %285 = vmatprep.subr.bf16.mxu0 0
    %286 = vmatpush2.bf16.msra.mxu0 %v237
    %287 = vmatprep.subr.bf16.mxu0 0
    %288 = vmatpush2.bf16.msra.mxu0 %v236
    %289 = vmatprep.subr.bf16.mxu0 0
    %290 = vmatpush2.bf16.msra.mxu0 %v235
    %291 = vmatprep.mubr.bf16.mxu0 %v98
    %292 = vmatmul.mubr.bf16.gmra.mxu0 %v97
    %v293 = vpop.f32.mrf.mxu0
    %v294 = vadd.f32 0.0, %v293
    %v295 = vpop.f32.mrf.mxu0
    %v296 = vpop.f32.mrf.mxu0
    %v297 = vadd.f32 0.0, %v296
    %v298 = vpop.f32.mrf.mxu0
    %299 = vdwg.mxu0
    %v300 = vld [vmem:[%s9] sm:$0xff]
    %v301 = vld [vmem:[#allocation7] sm:$0xf]
    %v302 = vpack.c.bf16 %v297, %v294
    %304 = vset.pattern.permute.xlu0 0
    %305 = vperm.xlu0 %304, %v300
    %v306 = vpop.permute.xlu0 %305
    %vm308 = vcmask 130048
    %v310 = vsel %vm308, %v301, 0
    %312 = vmatprep.subr.bf16.mxu0 0
    %313 = vmatpush1.bf16.msra.mxu0 0
    %314 = vmatprep.subr.bf16.mxu0 0
    %315 = vmatpush1.bf16.msra.mxu0 0
    %316 = vmatprep.subr.bf16.mxu0 0
    %317 = vmatpush1.bf16.msra.mxu0 0
    %318 = vmatprep.subr.bf16.mxu0 0
    %319 = vmatpush1.bf16.msra.mxu0 0
    %320 = vmatprep.subr.bf16.mxu0 0
    %321 = vmatpush1.bf16.msra.mxu0 0
    %322 = vmatprep.subr.bf16.mxu0 0
    %323 = vmatpush1.bf16.msra.mxu0 0
    %324 = vmatprep.subr.bf16.mxu0 0
    %325 = vmatpush1.bf16.msra.mxu0 0
    %326 = vmatprep.subr.bf16.mxu0 0
    %327 = vmatpush1.bf16.msra.mxu0 %v302
    %328 = vmatprep.subr.bf16.mxu0 0
    %329 = vmatpush2.bf16.msra.mxu0 0
    %330 = vmatprep.subr.bf16.mxu0 0
    %331 = vmatpush2.bf16.msra.mxu0 0
    %332 = vmatprep.subr.bf16.mxu0 0
    %333 = vmatpush2.bf16.msra.mxu0 0
    %334 = vmatprep.subr.bf16.mxu0 0
    %335 = vmatpush2.bf16.msra.mxu0 0
    %336 = vmatprep.subr.bf16.mxu0 0
    %337 = vmatpush2.bf16.msra.mxu0 0
    %338 = vmatprep.subr.bf16.mxu0 0
    %339 = vmatpush2.bf16.msra.mxu0 0
    %340 = vmatprep.subr.bf16.mxu0 0
    %341 = vmatpush2.bf16.msra.mxu0 0
    %342 = vmatprep.subr.bf16.mxu0 0
    %343 = vmatpush2.bf16.msra.mxu0 0
    %344 = vmatprep.mubr.bf16.mxu0 0
    %345 = vmatmul.mubr.bf16.gmra.mxu0 %v310
    %v346 = vpop.f32.mrf.mxu0
    %v347 = vadd.f32 %v306, %v346
    %v348 = vpop.f32.mrf.mxu0
    %v349 = vpop.f32.mrf.mxu0
    %v350 = vpop.f32.mrf.mxu0
    %351 = vdwg.mxu0
    %v352 = vld [vmem:[%s8] sm:$0xff]
    %vm353 = vcmask 64512
    %v355 = vsel %vm353, %v352, 0
    %357 = vmatprep.subr.mxu0 0.0
    %358 = vmatpush1.msra.mxu0 0.0
    %359 = vmatprep.subr.mxu0 0.0
    %360 = vmatpush1.msra.mxu0 0.0
    %361 = vmatprep.subr.mxu0 0.0
    %362 = vmatpush1.msra.mxu0 0.0
    %363 = vmatprep.subr.mxu0 0.0
    %364 = vmatpush1.msra.mxu0 0.0
    %365 = vmatprep.subr.mxu0 0.0
    %366 = vmatpush1.msra.mxu0 0.0
    %367 = vmatprep.subr.mxu0 0.0
    %368 = vmatpush1.msra.mxu0 0.0
    %369 = vmatprep.subr.mxu0 0.0
    %370 = vmatpush1.msra.mxu0 0.0
    %371 = vmatprep.subr.mxu0 0.0
    %372 = vmatpush1.msra.mxu0 0.0
    %373 = vmatprep.subr.mxu0 0.0
    %374 = vmatpush1.msra.mxu0 0.0
    %375 = vmatprep.subr.mxu0 0.0
    %376 = vmatpush1.msra.mxu0 0.0
    %377 = vmatprep.subr.mxu0 0.0
    %378 = vmatpush1.msra.mxu0 0.0
    %379 = vmatprep.subr.mxu0 0.0
    %380 = vmatpush1.msra.mxu0 0.0
    %381 = vmatprep.subr.mxu0 0.0
    %382 = vmatpush1.msra.mxu0 0.0
    %383 = vmatprep.subr.mxu0 0.0
    %384 = vmatpush1.msra.mxu0 0.0
    %385 = vmatprep.subr.mxu0 0.0
    %386 = vmatpush1.msra.mxu0 0.0
    %387 = vmatprep.subr.mxu0 0.0
    %388 = vmatpush1.msra.mxu0 %v347
    %389 = vmatprep.subr.mxu0 0.0
    %390 = vmatpush2.msra.mxu0 0.0
    %391 = vmatprep.subr.mxu0 0.0
    %392 = vmatpush2.msra.mxu0 0.0
    %393 = vmatprep.subr.mxu0 0.0
    %394 = vmatpush2.msra.mxu0 0.0
    %395 = vmatprep.subr.mxu0 0.0
    %396 = vmatpush2.msra.mxu0 0.0
    %397 = vmatprep.subr.mxu0 0.0
    %398 = vmatpush2.msra.mxu0 0.0
    %399 = vmatprep.subr.mxu0 0.0
    %400 = vmatpush2.msra.mxu0 0.0
    %401 = vmatprep.subr.mxu0 0.0
    %402 = vmatpush2.msra.mxu0 0.0
    %403 = vmatprep.subr.mxu0 0.0
    %404 = vmatpush2.msra.mxu0 0.0
    %405 = vmatprep.subr.mxu0 0.0
    %406 = vmatpush2.msra.mxu0 0.0
    %407 = vmatprep.subr.mxu0 0.0
    %408 = vmatpush2.msra.mxu0 0.0
    %409 = vmatprep.subr.mxu0 0.0
    %410 = vmatpush2.msra.mxu0 0.0
    %411 = vmatprep.subr.mxu0 0.0
    %412 = vmatpush2.msra.mxu0 0.0
    %413 = vmatprep.subr.mxu0 0.0
    %414 = vmatpush2.msra.mxu0 0.0
    %415 = vmatprep.subr.mxu0 0.0
    %416 = vmatpush2.msra.mxu0 0.0
    %417 = vmatprep.subr.mxu0 0.0
    %418 = vmatpush2.msra.mxu0 0.0
    %419 = vmatprep.subr.mxu0 0.0
    %420 = vmatpush2.msra.mxu0 0.0
    %421 = vmatprep.mubr.f32.mxu0 0.0
    %422 = vmatmul.mubr.f32.gmra.mxu0 %v355
    %v423 = vpop.f32.mrf.mxu0
    %v424 = vadd.f32 0.0, %v423
    %v425 = vpop.f32.mrf.mxu0
    %426 = vdwg.mxu0
    %v427 = vsub.f32 %v347, %v424
    %v428 = vmul.f32 %v427, %v427
    %429 = vmatprep.subr.mxu0 0.0
    %430 = vmatpush1.msra.mxu0 0.0
    %431 = vmatprep.subr.mxu0 0.0
    %432 = vmatpush1.msra.mxu0 0.0
    %433 = vmatprep.subr.mxu0 0.0
    %434 = vmatpush1.msra.mxu0 0.0
    %435 = vmatprep.subr.mxu0 0.0
    %436 = vmatpush1.msra.mxu0 0.0
    %437 = vmatprep.subr.mxu0 0.0
    %438 = vmatpush1.msra.mxu0 0.0
    %439 = vmatprep.subr.mxu0 0.0
    %440 = vmatpush1.msra.mxu0 0.0
    %441 = vmatprep.subr.mxu0 0.0
    %442 = vmatpush1.msra.mxu0 0.0
    %443 = vmatprep.subr.mxu0 0.0
    %444 = vmatpush1.msra.mxu0 0.0
    %445 = vmatprep.subr.mxu0 0.0
    %446 = vmatpush1.msra.mxu0 0.0
    %447 = vmatprep.subr.mxu0 0.0
    %448 = vmatpush1.msra.mxu0 0.0
    %449 = vmatprep.subr.mxu0 0.0
    %450 = vmatpush1.msra.mxu0 0.0
    %451 = vmatprep.subr.mxu0 0.0
    %452 = vmatpush1.msra.mxu0 0.0
    %453 = vmatprep.subr.mxu0 0.0
    %454 = vmatpush1.msra.mxu0 0.0
    %455 = vmatprep.subr.mxu0 0.0
    %456 = vmatpush1.msra.mxu0 0.0
    %457 = vmatprep.subr.mxu0 0.0
    %458 = vmatpush1.msra.mxu0 0.0
    %459 = vmatprep.subr.mxu0 0.0
    %460 = vmatpush1.msra.mxu0 %v428
    %461 = vmatprep.subr.mxu0 0.0
    %462 = vmatpush2.msra.mxu0 0.0
    %463 = vmatprep.subr.mxu0 0.0
    %464 = vmatpush2.msra.mxu0 0.0
    %465 = vmatprep.subr.mxu0 0.0
    %466 = vmatpush2.msra.mxu0 0.0
    %467 = vmatprep.subr.mxu0 0.0
    %468 = vmatpush2.msra.mxu0 0.0
    %469 = vmatprep.subr.mxu0 0.0
    %470 = vmatpush2.msra.mxu0 0.0
    %471 = vmatprep.subr.mxu0 0.0
    %472 = vmatpush2.msra.mxu0 0.0
    %473 = vmatprep.subr.mxu0 0.0
    %474 = vmatpush2.msra.mxu0 0.0
    %475 = vmatprep.subr.mxu0 0.0
    %476 = vmatpush2.msra.mxu0 0.0
    %477 = vmatprep.subr.mxu0 0.0
    %478 = vmatpush2.msra.mxu0 0.0
    %479 = vmatprep.subr.mxu0 0.0
    %480 = vmatpush2.msra.mxu0 0.0
    %481 = vmatprep.subr.mxu0 0.0
    %482 = vmatpush2.msra.mxu0 0.0
    %483 = vmatprep.subr.mxu0 0.0
    %484 = vmatpush2.msra.mxu0 0.0
    %485 = vmatprep.subr.mxu0 0.0
    %486 = vmatpush2.msra.mxu0 0.0
    %487 = vmatprep.subr.mxu0 0.0
    %488 = vmatpush2.msra.mxu0 0.0
    %489 = vmatprep.subr.mxu0 0.0
    %490 = vmatpush2.msra.mxu0 0.0
    %491 = vmatprep.subr.mxu0 0.0
    %492 = vmatpush2.msra.mxu0 0.0
    %493 = vmatprep.mubr.f32.mxu0 0.0
    %494 = vmatmul.mubr.f32.gmra.mxu0 %v355
    %v495 = vpop.f32.mrf.mxu0
    %v496 = vadd.f32 1e-05, %v495
    %v497 = vpop.f32.mrf.mxu0
    %498 = vdwg.mxu0
    %v499 = vrsqrt.pop %v496
    %v500 = vmul.f32 %v427, %v499
    %501 = vset.pattern.permute.xlu0 1
    %502 = vperm.xlu0 %501, %v300
    %v503 = vpop.permute.xlu0 %502
    %v505 = vmul.f32 %v500, %v503
    %506 = vset.pattern.permute.xlu0 2
    %507 = vperm.xlu0 %506, %v300
    %v508 = vpop.permute.xlu0 %507
    %v510 = vadd.f32 %v505, %v508
    %vm511 = vcmp.ge.f32.partialorder %v510, 0.0
    %512 = vset.pattern.permute.xlu0 3
    %513 = vperm.xlu0 %512, %v300
    %v514 = vpop.permute.xlu0 %513
    %v516 = vmul.f32 %v514, %v510
    %v517 = vsel %vm511, %v510, %v516
    %v518 = vld [vmem:[%s7] sm:$0xf]
    %v519 = vld [vmem:[%s7 + $0x4] sm:$0xf]
    %v520 = vpack.c.bf16 %v517, %v517
    %v521 = vld [vmem:[%s10] sm:$0xff]
    %v522 = vld [vmem:[%s10 + $0x8] sm:$0xff]
    %524 = vset.pattern.permute.xlu0 2
    %525 = vperm.xlu0 %524, %v521
    %v526 = vpop.permute.xlu0 %525
    %529 = vset.pattern.permute.xlu0 2
    %530 = vperm.xlu0 %529, %v522
    %v531 = vpop.permute.xlu0 %530
    %v535 = vunpack.c.l.b16 %v518
    %v536 = vunpack.c.l.b16 %v519
    %v537 = vpack.c.b16 %v536, %v535
    %v539 = vsel %vm353, %v537, 0
    %vm541 = vcmask 1043456
    %v543 = vsel %vm541, %v520, 0
    %545 = vmatprep.subr.bf16.mxu0 0
    %546 = vmatpush1.bf16.msra.mxu0 0
    %547 = vmatprep.subr.bf16.mxu0 0
    %548 = vmatpush1.bf16.msra.mxu0 0
    %549 = vmatprep.subr.bf16.mxu0 0
    %550 = vmatpush1.bf16.msra.mxu0 0
    %551 = vmatprep.subr.bf16.mxu0 0
    %552 = vmatpush1.bf16.msra.mxu0 0
    %553 = vmatprep.subr.bf16.mxu0 0
    %554 = vmatpush1.bf16.msra.mxu0 0
    %555 = vmatprep.subr.bf16.mxu0 0
    %556 = vmatpush1.bf16.msra.mxu0 0
    %557 = vmatprep.subr.bf16.mxu0 0
    %558 = vmatpush1.bf16.msra.mxu0 0
    %559 = vmatprep.subr.bf16.mxu0 0
    %560 = vmatpush1.bf16.msra.mxu0 %v543
    %561 = vmatprep.subr.bf16.mxu0 0
    %562 = vmatpush2.bf16.msra.mxu0 0
    %563 = vmatprep.subr.bf16.mxu0 0
    %564 = vmatpush2.bf16.msra.mxu0 0
    %565 = vmatprep.subr.bf16.mxu0 0
    %566 = vmatpush2.bf16.msra.mxu0 0
    %567 = vmatprep.subr.bf16.mxu0 0
    %568 = vmatpush2.bf16.msra.mxu0 0
    %569 = vmatprep.subr.bf16.mxu0 0
    %570 = vmatpush2.bf16.msra.mxu0 0
    %571 = vmatprep.subr.bf16.mxu0 0
    %572 = vmatpush2.bf16.msra.mxu0 0
    %573 = vmatprep.subr.bf16.mxu0 0
    %574 = vmatpush2.bf16.msra.mxu0 0
    %575 = vmatprep.subr.bf16.mxu0 0
    %576 = vmatpush2.bf16.msra.mxu0 0
    %577 = vmatprep.mubr.bf16.mxu0 0
    %578 = vmatmul.mubr.bf16.gmra.mxu0 %v539
    %v579 = vpop.f32.mrf.mxu0
    %v580 = vadd.f32 %v526, %v579
    %v581 = vpop.f32.mrf.mxu0
    %v582 = vpop.f32.mrf.mxu0
    %v583 = vadd.f32 %v531, %v582
    %v584 = vpop.f32.mrf.mxu0
    %585 = vdwg.mxu0
    %v586 = vpack.c.bf16 %v583, %v580
    %v587 = vld [vmem:[%s5] sm:$0xff]
    %v588 = vld [vmem:[%s5 + $0x8] sm:$0xff]
    %v591 = vunpack.c.l.b16 %v587
    %v592 = vunpack.c.h.b16 %v587
    %v593 = vunpack.c.l.b16 %v588
    %v594 = vunpack.c.h.b16 %v588
    %v595 = vpack.c.b16 %v593, %v591
    %v596 = vpack.c.b16 %v594, %v592
    %v600 = vsel %vm308, %v586, 0
    %602 = vmatprep.subr.bf16.mxu0 0
    %603 = vmatpush1.bf16.msra.mxu0 0
    %604 = vmatprep.subr.bf16.mxu0 0
    %605 = vmatpush1.bf16.msra.mxu0 0
    %606 = vmatprep.subr.bf16.mxu0 0
    %607 = vmatpush1.bf16.msra.mxu0 0
    %608 = vmatprep.subr.bf16.mxu0 0
    %609 = vmatpush1.bf16.msra.mxu0 0
    %610 = vmatprep.subr.bf16.mxu0 0
    %611 = vmatpush1.bf16.msra.mxu0 0
    %612 = vmatprep.subr.bf16.mxu0 0
    %613 = vmatpush1.bf16.msra.mxu0 0
    %614 = vmatprep.subr.bf16.mxu0 0
    %615 = vmatpush1.bf16.msra.mxu0 0
    %616 = vmatprep.subr.bf16.mxu0 %v596
    %617 = vmatpush1.bf16.msra.mxu0 %v595
    %618 = vmatprep.subr.bf16.mxu0 0
    %619 = vmatpush2.bf16.msra.mxu0 0
    %620 = vmatprep.subr.bf16.mxu0 0
    %621 = vmatpush2.bf16.msra.mxu0 0
    %622 = vmatprep.subr.bf16.mxu0 0
    %623 = vmatpush2.bf16.msra.mxu0 0
    %624 = vmatprep.subr.bf16.mxu0 0
    %625 = vmatpush2.bf16.msra.mxu0 0
    %626 = vmatprep.subr.bf16.mxu0 0
    %627 = vmatpush2.bf16.msra.mxu0 0
    %628 = vmatprep.subr.bf16.mxu0 0
    %629 = vmatpush2.bf16.msra.mxu0 0
    %630 = vmatprep.subr.bf16.mxu0 0
    %631 = vmatpush2.bf16.msra.mxu0 0
    %632 = vmatprep.subr.bf16.mxu0 0
    %633 = vmatpush2.bf16.msra.mxu0 0
    %634 = vmatprep.mubr.bf16.mxu0 0
    %635 = vmatmul.mubr.bf16.gmra.mxu0 %v600
    %v636 = vpop.f32.mrf.mxu0
    %v637 = vadd.f32 0.0, %v636
    %v638 = vpop.f32.mrf.mxu0
    %v639 = vadd.f32 0.0, %v638
    %v640 = vpop.f32.mrf.mxu0
    %v641 = vadd.f32 0.0, %v640
    %v642 = vpop.f32.mrf.mxu0
    %v643 = vadd.f32 0.0, %v642
    %644 = vdwg.mxu0
    %v645 = vld [vmem:[%s11] sm:$0x3]
    %v646 = vlaneseq
    %v647 = vshrl.u32 %v646, 7
    %v648 = vsub.s32 0, %v647
    %v649 = vrot.slane %v645, %v648
    %v682 = vunpack.c.l.b16 %v99
    %v683 = vunpack.c.l.b16 %v100
    %v684 = vunpack.c.l.b16 %v101
    %v685 = vunpack.c.l.b16 %v102
    %v686 = vunpack.c.l.b16 %v103
    %v687 = vunpack.c.l.b16 %v104
    %v688 = vunpack.c.l.b16 %v105
    %v689 = vunpack.c.l.b16 %v106
    %v690 = vunpack.c.l.b16 %v107
    %v691 = vunpack.c.l.b16 %v108
    %v692 = vunpack.c.l.b16 %v109
    %v693 = vunpack.c.l.b16 %v110
    %v694 = vunpack.c.l.b16 %v111
    %v695 = vunpack.c.l.b16 %v112
    %v696 = vunpack.c.l.b16 %v113
    %v697 = vunpack.c.l.b16 %v114
    %v698 = vunpack.c.l.b16 %v115
    %v699 = vunpack.c.l.b16 %v116
    %v700 = vunpack.c.l.b16 %v117
    %v701 = vunpack.c.l.b16 %v118
    %v702 = vunpack.c.l.b16 %v119
    %v703 = vunpack.c.l.b16 %v120
    %v704 = vunpack.c.l.b16 %v121
    %v705 = vunpack.c.l.b16 %v122
    %v706 = vunpack.c.l.b16 %v123
    %v707 = vunpack.c.l.b16 %v124
    %v708 = vunpack.c.l.b16 %v125
    %v709 = vunpack.c.l.b16 %v126
    %v710 = vunpack.c.l.b16 %v127
    %v711 = vunpack.c.l.b16 %v128
    %v712 = vunpack.c.l.b16 %v129
    %v713 = vunpack.c.l.b16 %v130
    %v714 = vpack.c.b16 %v683, %v682
    %v715 = vpack.c.b16 %v685, %v684
    %v716 = vpack.c.b16 %v687, %v686
    %v717 = vpack.c.b16 %v689, %v688
    %v718 = vpack.c.b16 %v691, %v690
    %v719 = vpack.c.b16 %v693, %v692
    %v720 = vpack.c.b16 %v695, %v694
    %v721 = vpack.c.b16 %v697, %v696
    %v722 = vpack.c.b16 %v699, %v698
    %v723 = vpack.c.b16 %v701, %v700
    %v724 = vpack.c.b16 %v703, %v702
    %v725 = vpack.c.b16 %v705, %v704
    %v726 = vpack.c.b16 %v707, %v706
    %v727 = vpack.c.b16 %v709, %v708
    %v728 = vpack.c.b16 %v711, %v710
    %v729 = vpack.c.b16 %v713, %v712
    %746 = vmatprep.subr.bf16.mxu0 0
    %747 = vmatpush1.bf16.msra.mxu0 %v721
    %748 = vmatprep.subr.bf16.mxu0 0
    %749 = vmatpush1.bf16.msra.mxu0 %v720
    %750 = vmatprep.subr.bf16.mxu0 0
    %751 = vmatpush1.bf16.msra.mxu0 %v719
    %752 = vmatprep.subr.bf16.mxu0 0
    %753 = vmatpush1.bf16.msra.mxu0 %v718
    %754 = vmatprep.subr.bf16.mxu0 0
    %755 = vmatpush1.bf16.msra.mxu0 %v717
    %756 = vmatprep.subr.bf16.mxu0 0
    %757 = vmatpush1.bf16.msra.mxu0 %v716
    %758 = vmatprep.subr.bf16.mxu0 0
    %759 = vmatpush1.bf16.msra.mxu0 %v715
    %760 = vmatprep.subr.bf16.mxu0 0
    %761 = vmatpush1.bf16.msra.mxu0 %v714
    %762 = vmatprep.subr.bf16.mxu0 0
    %763 = vmatpush2.bf16.msra.mxu0 %v729
    %764 = vmatprep.subr.bf16.mxu0 0
    %765 = vmatpush2.bf16.msra.mxu0 %v728
    %766 = vmatprep.subr.bf16.mxu0 0
    %767 = vmatpush2.bf16.msra.mxu0 %v727
    %768 = vmatprep.subr.bf16.mxu0 0
    %769 = vmatpush2.bf16.msra.mxu0 %v726
    %770 = vmatprep.subr.bf16.mxu0 0
    %771 = vmatpush2.bf16.msra.mxu0 %v725
    %772 = vmatprep.subr.bf16.mxu0 0
    %773 = vmatpush2.bf16.msra.mxu0 %v724
    %774 = vmatprep.subr.bf16.mxu0 0
    %775 = vmatpush2.bf16.msra.mxu0 %v723
    %776 = vmatprep.subr.bf16.mxu0 0
    %777 = vmatpush2.bf16.msra.mxu0 %v722
    %778 = vmatprep.mubr.bf16.mxu0 %v98
    %779 = vmatmul.mubr.bf16.gmra.mxu0 %v97
    %v780 = vpop.f32.mrf.mxu0
    %v781 = vadd.f32 %v649, %v780
    %v782 = vpop.f32.mrf.mxu0
    %v783 = vpop.f32.mrf.mxu0
    %v784 = vadd.f32 %v649, %v783
    %v785 = vpop.f32.mrf.mxu0
    %786 = vdwg.mxu0
    %v787 = vrot.slane %v781, 4
    %v788 = vadd.f32 %v781, %v787
    %v789 = vrot.slane %v788, 2
    %v790 = vadd.f32 %v788, %v789
    %v791 = vrot.slane %v790, 1
    %v792 = vadd.f32 %v790, %v791
    %v793 = vrot.slane %v784, 4
    %v794 = vadd.f32 %v784, %v793
    %v795 = vrot.slane %v794, 2
    %v796 = vadd.f32 %v794, %v795
    %v797 = vrot.slane %v796, 1
    %v798 = vadd.f32 %v796, %v797
    %v799 = vrcp.pop 8.0
    %v800 = vmul.f32 %v792, %v799
    %v801 = vmul.f32 %v798, %v799
    %v802 = vsub.f32 %v781, %v800
    %v803 = vsub.f32 %v784, %v801
    %v804 = vmul.f32 %v802, %v802
    %v805 = vmul.f32 %v803, %v803
    %v806 = vrot.slane %v804, 4
    %v807 = vadd.f32 %v804, %v806
    %v808 = vrot.slane %v807, 2
    %v809 = vadd.f32 %v807, %v808
    %v810 = vrot.slane %v809, 1
    %v811 = vadd.f32 %v809, %v810
    %v812 = vrot.slane %v805, 4
    %v813 = vadd.f32 %v805, %v812
    %v814 = vrot.slane %v813, 2
    %v815 = vadd.f32 %v813, %v814
    %v816 = vrot.slane %v815, 1
    %v817 = vadd.f32 %v815, %v816
    %v818 = vmul.f32 %v811, %v799
    %v819 = vmul.f32 %v817, %v799
    %v820 = vadd.f32 %v818, 1e-05
    %v821 = vadd.f32 %v819, 1e-05
    %v822 = vrsqrt.pop %v820
    %v823 = vrsqrt.pop %v821
    %v824 = vmul.f32 %v802, %v822
    %v825 = vmul.f32 %v803, %v823
    %826 = vset.pattern.permute.xlu0 0
    %827 = vperm.xlu0 %826, %v521
    %v828 = vpop.permute.xlu0 %827
    %830 = vset.pattern.permute.xlu0 0
    %831 = vperm.xlu0 %830, %v522
    %v832 = vpop.permute.xlu0 %831
    %v834 = vmul.f32 %v824, %v828
    %v835 = vmul.f32 %v825, %v832
    %836 = vset.pattern.permute.xlu0 1
    %837 = vperm.xlu0 %836, %v521
    %v838 = vpop.permute.xlu0 %837
    %840 = vset.pattern.permute.xlu0 1
    %841 = vperm.xlu0 %840, %v522
    %v842 = vpop.permute.xlu0 %841
    %v844 = vadd.f32 %v834, %v838
    %v845 = vadd.f32 %v835, %v842
    %vm846 = vcmp.ge.f32.partialorder %v844, 0.0
    %vm847 = vcmp.ge.f32.partialorder %v845, 0.0
    %v848 = vlaneseq
    %v849 = vshrl.u32 %v848, 7
    %v850 = vsub.s32 1, %v849
    %v851 = vrot.slane %v645, %v850
    %v852 = vmul.f32 %v851, %v844
    %v853 = vmul.f32 %v851, %v845
    %v854 = vsel %vm846, %v844, %v852
    %v855 = vsel %vm847, %v845, %v853
    %v856 = vpack.c.bf16 %v855, %v854
    %v857 = vld [vmem:[#allocation5] sm:$0xff]
    %v858 = vld [vmem:[#allocation5 + $0x8] sm:$0xff]
    %v859 = vld [vmem:[#allocation5 + $0x10] sm:$0xff]
    %v860 = vld [vmem:[#allocation5 + $0x18] sm:$0xff]
    %v861 = vld [vmem:[#allocation5 + $0x20] sm:$0xff]
    %v862 = vld [vmem:[#allocation5 + $0x28] sm:$0xff]
    %v863 = vld [vmem:[#allocation5 + $0x30] sm:$0xff]
    %v864 = vld [vmem:[#allocation5 + $0x38] sm:$0xff]
    %v865 = vld [vmem:[#allocation5 + $0x40] sm:$0xff]
    %v866 = vld [vmem:[#allocation5 + $0x48] sm:$0xff]
    %v867 = vld [vmem:[#allocation5 + $0x50] sm:$0xff]
    %v868 = vld [vmem:[#allocation5 + $0x58] sm:$0xff]
    %v869 = vld [vmem:[#allocation5 + $0x60] sm:$0xff]
    %v870 = vld [vmem:[#allocation5 + $0x68] sm:$0xff]
    %v871 = vld [vmem:[#allocation5 + $0x70] sm:$0xff]
    %v872 = vld [vmem:[#allocation5 + $0x78] sm:$0xff]
    %v873 = vld [vmem:[%s12] sm:$0x3]
    %v875 = vlaneseq
    %v876 = vshrl.u32 %v875, 7
    %v877 = vsub.s32 0, %v876
    %v878 = vrot.slane %v873, %v877
    %v879 = vlaneseq
    %v880 = vshrl.u32 %v879, 7
    %v881 = vsub.s32 1, %v880
    %v882 = vrot.slane %v873, %v881
    %v901 = vunpack.c.l.b16 %v857
    %v902 = vunpack.c.h.b16 %v857
    %v903 = vunpack.c.l.b16 %v858
    %v904 = vunpack.c.h.b16 %v858
    %v905 = vunpack.c.l.b16 %v859
    %v906 = vunpack.c.h.b16 %v859
    %v907 = vunpack.c.l.b16 %v860
    %v908 = vunpack.c.h.b16 %v860
    %v909 = vunpack.c.l.b16 %v861
    %v910 = vunpack.c.h.b16 %v861
    %v911 = vunpack.c.l.b16 %v862
    %v912 = vunpack.c.h.b16 %v862
    %v913 = vunpack.c.l.b16 %v863
    %v914 = vunpack.c.h.b16 %v863
    %v915 = vunpack.c.l.b16 %v864
    %v916 = vunpack.c.h.b16 %v864
    %v917 = vunpack.c.l.b16 %v865
    %v918 = vunpack.c.h.b16 %v865
    %v919 = vunpack.c.l.b16 %v866
    %v920 = vunpack.c.h.b16 %v866
    %v921 = vunpack.c.l.b16 %v867
    %v922 = vunpack.c.h.b16 %v867
    %v923 = vunpack.c.l.b16 %v868
    %v924 = vunpack.c.h.b16 %v868
    %v925 = vunpack.c.l.b16 %v869
    %v926 = vunpack.c.h.b16 %v869
    %v927 = vunpack.c.l.b16 %v870
    %v928 = vunpack.c.h.b16 %v870
    %v929 = vunpack.c.l.b16 %v871
    %v930 = vunpack.c.h.b16 %v871
    %v931 = vunpack.c.l.b16 %v872
    %v932 = vunpack.c.h.b16 %v872
    %v933 = vpack.c.b16 %v903, %v901
    %v934 = vpack.c.b16 %v904, %v902
    %v935 = vpack.c.b16 %v907, %v905
    %v936 = vpack.c.b16 %v908, %v906
    %v937 = vpack.c.b16 %v911, %v909
    %v938 = vpack.c.b16 %v912, %v910
    %v939 = vpack.c.b16 %v915, %v913
    %v940 = vpack.c.b16 %v916, %v914
    %v941 = vpack.c.b16 %v919, %v917
    %v942 = vpack.c.b16 %v920, %v918
    %v943 = vpack.c.b16 %v923, %v921
    %v944 = vpack.c.b16 %v924, %v922
    %v945 = vpack.c.b16 %v927, %v925
    %v946 = vpack.c.b16 %v928, %v926
    %v947 = vpack.c.b16 %v931, %v929
    %v948 = vpack.c.b16 %v932, %v930
    %965 = vmatprep.subr.bf16.mxu0 %v948
    %966 = vmatpush1.bf16.msra.mxu0 %v947
    %967 = vmatprep.subr.bf16.mxu0 %v946
    %968 = vmatpush1.bf16.msra.mxu0 %v945
    %969 = vmatprep.subr.bf16.mxu0 %v944
    %970 = vmatpush1.bf16.msra.mxu0 %v943
    %971 = vmatprep.subr.bf16.mxu0 %v942
    %972 = vmatpush1.bf16.msra.mxu0 %v941
    %973 = vmatprep.subr.bf16.mxu0 %v940
    %974 = vmatpush1.bf16.msra.mxu0 %v939
    %975 = vmatprep.subr.bf16.mxu0 %v938
    %976 = vmatpush1.bf16.msra.mxu0 %v937
    %977 = vmatprep.subr.bf16.mxu0 %v936
    %978 = vmatpush1.bf16.msra.mxu0 %v935
    %979 = vmatprep.subr.bf16.mxu0 %v934
    %980 = vmatpush1.bf16.msra.mxu0 %v933
    %981 = vmatprep.subr.bf16.mxu0 0
    %982 = vmatpush2.bf16.msra.mxu0 0
    %983 = vmatprep.subr.bf16.mxu0 0
    %984 = vmatpush2.bf16.msra.mxu0 0
    %985 = vmatprep.subr.bf16.mxu0 0
    %986 = vmatpush2.bf16.msra.mxu0 0
    %987 = vmatprep.subr.bf16.mxu0 0
    %988 = vmatpush2.bf16.msra.mxu0 0
    %989 = vmatprep.subr.bf16.mxu0 0
    %990 = vmatpush2.bf16.msra.mxu0 0
    %991 = vmatprep.subr.bf16.mxu0 0
    %992 = vmatpush2.bf16.msra.mxu0 0
    %993 = vmatprep.subr.bf16.mxu0 0
    %994 = vmatpush2.bf16.msra.mxu0 0
    %995 = vmatprep.subr.bf16.mxu0 0
    %996 = vmatpush2.bf16.msra.mxu0 0
    %997 = vmatprep.mubr.bf16.mxu0 0
    %998 = vmatmul.mubr.bf16.gmra.mxu0 %v856
    %v999 = vpop.f32.mrf.mxu0
    %v1000 = vadd.f32 %v878, %v999
    %v1001 = vpop.f32.mrf.mxu0
    %v1002 = vadd.f32 %v882, %v1001
    %v1003 = vpop.f32.mrf.mxu0
    %v1004 = vadd.f32 %v878, %v1003
    %v1005 = vpop.f32.mrf.mxu0
    %v1006 = vadd.f32 %v882, %v1005
    %1007 = vdwg.mxu0
    %v1008 = vadd.f32 %v1000, %v637
    %v1009 = vadd.f32 %v1002, %v639
    %v1010 = vadd.f32 %v1004, %v641
    %v1011 = vadd.f32 %v1006, %v643
    %v1012 = vxor.u32 %v1008, 2147483648
    %v1013 = vxor.u32 %v1009, 2147483648
    %v1014 = vxor.u32 %v1010, 2147483648
    %v1015 = vxor.u32 %v1011, 2147483648
    %v1016 = vmul.f32 %v1012, 1.442695
    %v1017 = vpow.pop %v1016
    %v1018 = vmul.f32 %v1013, 1.442695
    %v1019 = vpow.pop %v1018
    %v1020 = vmul.f32 %v1014, 1.442695
    %v1021 = vpow.pop %v1020
    %v1022 = vmul.f32 %v1015, 1.442695
    %v1023 = vpow.pop %v1022
    %v1024 = vadd.f32 %v1017, 1.0
    %v1025 = vadd.f32 %v1019, 1.0
    %v1026 = vadd.f32 %v1021, 1.0
    %v1027 = vadd.f32 %v1023, 1.0
    %v1028 = vrcp.pop %v1024
    %v1029 = vmul.f32 1.0, %v1028
    %v1030 = vrcp.pop %v1025
    %v1031 = vmul.f32 1.0, %v1030
    %v1032 = vrcp.pop %v1026
    %v1033 = vmul.f32 1.0, %v1032
    %v1034 = vrcp.pop %v1027
    %v1035 = vmul.f32 1.0, %v1034
    %v1036 = vsub.f32 %v85, %v89
    %v1037 = vsub.f32 %v86, %v90
    %v1038 = vsub.f32 %v87, %v91
    %v1039 = vsub.f32 %v88, %v92
    %v1040 = vmul.f32 %v1029, %v1036
    %v1041 = vmul.f32 %v1031, %v1037
    %v1042 = vmul.f32 %v1033, %v1038
    %v1043 = vmul.f32 %v1035, %v1039
    %v1044 = vadd.f32 %v89, %v1040
    %v1045 = vadd.f32 %v90, %v1041
    %v1046 = vadd.f32 %v91, %v1042
    %v1047 = vadd.f32 %v92, %v1043
    %1048 = vst [vmem:[#allocation8] sm:$0xff] %v1044
    %1049 = vst [vmem:[#allocation8 + $0x8] sm:$0xff] %v1045
    %1050 = vst [vmem:[#allocation8 + $0x10] sm:$0xff] %v1046
    %1051 = vst [vmem:[#allocation8 + $0x18] sm:$0xff] %v1047
    // Predicated region
    $region66: #{tpu_custom_call.1} parent=1 // pred_check
      _
    $region67: #{tpu_custom_call.1} parent=1 // pred_check_branch
      %1053 = sbr.rel (0) target = $region69
    $region68: #{tpu_custom_call.1} parent=1 // pred_region
      %s1055 = ssub.s32 512, 512
      %1056 = vsyncadd [#allocation4], %s1055
      %s1057 = sshll.u32 [#allocation8], 4
      %s1058 = int_to_ptr.vmem [resolvable:$true] %s1057
      %1063 = dma.vmem_to_hbm [thread:$0]  %s1058, 512, %s13, [#allocation4], 256, 256, 16
    $region69: #{tpu_custom_call.1} parent=1 // pred_fallthru
      _
    // Predicated region
    $region70: #{tpu_custom_call.1} parent=1 // pred_check
      _
    $region71: #{tpu_custom_call.1} parent=1 // pred_check_branch
      %1065 = sbr.rel (0) target = $region73
    $region72: #{tpu_custom_call.1} parent=1 // pred_region
      %1066 = dma.done [#allocation4], 512
    $region73: #{tpu_custom_call.1} parent=1 // pred_fallthru
      _
    %1067 = vsyncpa [#allocation3], 1
    %1068 = vsyncpa [#allocation6], 1
    %1069 = vsyncpa [#allocation4], 1

// kernel: tpu_custom_call.1
$region0: #{tpu_custom_call.1}
  #allocation0 [shape = 'u32[]', space=smem, size = 0x4, offset = 0x4, fixed_abs, tag = 'smem constant byte address 0x4 - core index']
  #allocation1 [shape = 'u32[144,128]{1,0:T(1,128)}', space=vmem, size = 0x12000, scoped, tag = 'internal scratch']
  %s0 = inlined_call_operand.vmem [shape: f32[1,16,256], index: 0, kind: input, shape index: {}]
  %s1 = inlined_call_operand.hbm [shape: f32[1,16,256], index: 1, kind: input, shape index: {}]
  %s2 = inlined_call_operand.vmem [shape: bf16[256,128], index: 2, kind: input, shape index: {}]
  %s3 = inlined_call_operand.hbm [shape: bf16[128,256], index: 3, kind: input, shape index: {}]
  %s4 = inlined_call_operand.vmem [shape: bf16[256,16], index: 4, kind: input, shape index: {}]
  %s5 = inlined_call_operand.vmem [shape: bf16[16,256], index: 5, kind: input, shape index: {}]
  %s6 = inlined_call_operand.hbm [shape: bf16[8,16], index: 6, kind: input, shape index: {}]
  %s7 = inlined_call_operand.vmem [shape: bf16[16,8], index: 7, kind: input, shape index: {}]
  %s8 = inlined_call_operand.vmem [shape: f32[8,8], index: 8, kind: input, shape index: {}]
  %s9 = inlined_call_operand.vmem [shape: f32[8,4], index: 9, kind: input, shape index: {}]
  %s10 = inlined_call_operand.vmem [shape: f32[16,3], index: 10, kind: input, shape index: {}]
  %s11 = inlined_call_operand.vmem [shape: f32[2,128], index: 11, kind: input, shape index: {}]
  %s12 = inlined_call_operand.vmem [shape: f32[1,256], index: 12, kind: input, shape index: {}]
  %s13 = inlined_call_operand.hbm [shape: f32[1,16,256], index: 13, kind: output, shape index: {}]
  %s14 = sld [smem:[#allocation0]]
  $region74: #{tpu_custom_call.1} parent=0
    _
  %s16 = ssub.s32 1, %s14
  %s17 = scalar_select 0, %s16, %s14
  $region1: #{tpu_custom_call.1} parent=0
    #allocation2 [shape = 'u8[16384]{0}', space=vmem, size = 0x4000, scoped, tag = 'input window, operand 1, single buffered']
    #allocation3 [shape = 's32[1]{0}', space=sflag, size = 0x4, scoped, tag = 'scoped memory for tpu_custom_call.1']
    #allocation4 [shape = 's32[1]{0}', space=sflag, size = 0x4, scoped, tag = 'scoped memory for tpu_custom_call.1']
    #allocation5 [shape = 'u8[65536]{0}', space=vmem, size = 0x10000, scoped, tag = 'input window, operand 3, single buffered']
    #allocation6 [shape = 's32[1]{0}', space=sflag, size = 0x4, scoped, tag = 'scoped memory for tpu_custom_call.1']
    #allocation7 [shape = 'u8[2048]{0}', space=vmem, size = 0x800, scoped, tag = 'input window, operand 6, single buffered']
    #allocation8 [shape = 'u8[16384]{0}', space=vmem, size = 0x4000, scoped, tag = 'output window, operand 0, single buffered']
    %18 = vsyncpa [#allocation3], 0
    %19 = vsyncpa [#allocation6], 0
    %20 = vsyncpa [#allocation4], 0
    // Predicated region
    $region2: #{tpu_custom_call.1} parent=1 // pred_check
      _
    $region3: #{tpu_custom_call.1} parent=1 // pred_check_branch
      %22 = sbr.rel (0) target = $region5
    $region4: #{tpu_custom_call.1} parent=1 // pred_region
      _
    $region5: #{tpu_custom_call.1} parent=1 // pred_fallthru
      _
    // Predicated region
    $region6: #{tpu_custom_call.1} parent=1 // pred_check
      _
    $region7: #{tpu_custom_call.1} parent=1 // pred_check_branch
      %24 = sbr.rel (0) target = $region9
    $region8: #{tpu_custom_call.1} parent=1 // pred_region
      %s26 = ssub.s32 512, 512
      %27 = vsyncadd [#allocation3], %s26
      %s28 = sshll.u32 [#allocation2], 4
      %s29 = int_to_ptr.vmem [resolvable:$true] %s28
      %34 = dma.hbm_to_vmem [thread:$0]  %s1, 512, %s29, [#allocation3], 256, 256, 16
    $region9: #{tpu_custom_call.1} parent=1 // pred_fallthru
      _
    // Predicated region
    $region10: #{tpu_custom_call.1} parent=1 // pred_check
      _
    $region11: #{tpu_custom_call.1} parent=1 // pred_check_branch
      %36 = sbr.rel (0) target = $region13
    $region12: #{tpu_custom_call.1} parent=1 // pred_region
      _
    $region13: #{tpu_custom_call.1} parent=1 // pred_fallthru
      _
    // Predicated region
    $region14: #{tpu_custom_call.1} parent=1 // pred_check
      _
    $region15: #{tpu_custom_call.1} parent=1 // pred_check_branch
      %38 = sbr.rel (0) target = $region17
    $region16: #{tpu_custom_call.1} parent=1 // pred_region
      %s40 = ssub.s32 2048, 2048
      %41 = vsyncadd [#allocation6], %s40
      %s42 = sshll.u32 [#allocation5], 4
      %s43 = int_to_ptr.vmem [resolvable:$true] %s42
      %48 = dma.hbm_to_vmem [thread:$0]  %s3, 2048, %s43, [#allocation6], 128, 128, 8
    $region17: #{tpu_custom_call.1} parent=1 // pred_fallthru
      _
    // Predicated region
    $region18: #{tpu_custom_call.1} parent=1 // pred_check
      _
    $region19: #{tpu_custom_call.1} parent=1 // pred_check_branch
      %50 = sbr.rel (0) target = $region21
    $region20: #{tpu_custom_call.1} parent=1 // pred_region
      _
    $region21: #{tpu_custom_call.1} parent=1 // pred_fallthru
      _
    // Predicated region
    $region22: #{tpu_custom_call.1} parent=1 // pred_check
      _
    $region23: #{tpu_custom_call.1} parent=1 // pred_check_branch
      %52 = sbr.rel (0) target = $region25
    $region24: #{tpu_custom_call.1} parent=1 // pred_region
      _
    $region25: #{tpu_custom_call.1} parent=1 // pred_fallthru
      _
    // Predicated region
    $region26: #{tpu_custom_call.1} parent=1 // pred_check
      _
    $region27: #{tpu_custom_call.1} parent=1 // pred_check_branch
      %54 = sbr.rel (0) target = $region29
    $region28: #{tpu_custom_call.1} parent=1 // pred_region
      %s56 = ssub.s32 64, 64
      %57 = vsyncadd [#allocation6], %s56
      %s59 = sshll.u32 [#allocation7], 4
      %s60 = int_to_ptr.vmem [resolvable:$true] %s59
      %62 = dma.hbm_to_vmem [thread:$0]  %s6, 64, %s60, [#allocation6]
    $region29: #{tpu_custom_call.1} parent=1 // pred_fallthru
      _
    // Predicated region
    $region30: #{tpu_custom_call.1} parent=1 // pred_check
      _
    $region31: #{tpu_custom_call.1} parent=1 // pred_check_branch
      %64 = sbr.rel (0) target = $region33
    $region32: #{tpu_custom_call.1} parent=1 // pred_region
      _
    $region33: #{tpu_custom_call.1} parent=1 // pred_fallthru
      _
    // Predicated region
    $region34: #{tpu_custom_call.1} parent=1 // pred_check
      _
    $region35: #{tpu_custom_call.1} parent=1 // pred_check_branch
      %66 = sbr.rel (0) target = $region37
    $region36: #{tpu_custom_call.1} parent=1 // pred_region
      _
    $region37: #{tpu_custom_call.1} parent=1 // pred_fallthru
      _
    // Predicated region
    $region38: #{tpu_custom_call.1} parent=1 // pred_check
      _
    $region39: #{tpu_custom_call.1} parent=1 // pred_check_branch
      %68 = sbr.rel (0) target = $region41
    $region40: #{tpu_custom_call.1} parent=1 // pred_region
      _
    $region41: #{tpu_custom_call.1} parent=1 // pred_fallthru
      _
    // Predicated region
    $region42: #{tpu_custom_call.1} parent=1 // pred_check
      _
    $region43: #{tpu_custom_call.1} parent=1 // pred_check_branch
      %70 = sbr.rel (0) target = $region45
    $region44: #{tpu_custom_call.1} parent=1 // pred_region
      _
    $region45: #{tpu_custom_call.1} parent=1 // pred_fallthru
      _
    // Predicated region
    $region46: #{tpu_custom_call.1} parent=1 // pred_check
      _
    $region47: #{tpu_custom_call.1} parent=1 // pred_check_branch
      %72 = sbr.rel (0) target = $region49
    $region48: #{tpu_custom_call.1} parent=1 // pred_region
      _
    $region49: #{tpu_custom_call.1} parent=1 // pred_fallthru
      _
    // Predicated region
    $region50: #{tpu_custom_call.1} parent=1 // pred_check
      _
    $region51: #{tpu_custom_call.1} parent=1 // pred_check_branch
      %74 = sbr.rel (0) target = $region53
    $region52: #{tpu_custom_call.1} parent=1 // pred_region
      _
    $region53: #{tpu_custom_call.1} parent=1 // pred_fallthru
      _
    // Predicated region
    $region54: #{tpu_custom_call.1} parent=1 // pred_check
      _
    $region55: #{tpu_custom_call.1} parent=1 // pred_check_branch
      %76 = sbr.rel (0) target = $region57
    $region56: #{tpu_custom_call.1} parent=1 // pred_region
      %77 = dma.done [#allocation3], 512
    $region57: #{tpu_custom_call.1} parent=1 // pred_fallthru
      _
    // Predicated region
    $region58: #{tpu_custom_call.1} parent=1 // pred_check
      _
    $region59: #{tpu_custom_call.1} parent=1 // pred_check_branch
      %79 = sbr.rel (0) target = $region61
    $region60: #{tpu_custom_call.1} parent=1 // pred_region
      %80 = dma.done [#allocation6], 2048
    $region61: #{tpu_custom_call.1} parent=1 // pred_fallthru
      _
    // Predicated region
    $region62: #{tpu_custom_call.1} parent=1 // pred_check
      _
    $region63: #{tpu_custom_call.1} parent=1 // pred_check_branch
      %82 = sbr.rel (0) target = $region65
    $region64: #{tpu_custom_call.1} parent=1 // pred_region
      %83 = dma.done [#allocation6], 64
    $region65: #{tpu_custom_call.1} parent=1 // pred_fallthru
      _
    %v85 = vld [vmem:[%s0] sm:$0xff]
    %v86 = vld [vmem:[%s0 + $0x8] sm:$0xff]
    %v87 = vld [vmem:[%s0 + $0x10] sm:$0xff]
    %v88 = vld [vmem:[%s0 + $0x18] sm:$0xff]
    %v89 = vld [vmem:[#allocation2] sm:$0xff]
    %v90 = vld [vmem:[#allocation2 + $0x8] sm:$0xff]
    %v91 = vld [vmem:[#allocation2 + $0x10] sm:$0xff]
    %v92 = vld [vmem:[#allocation2 + $0x18] sm:$0xff]
    %v93 = vadd.f32 %v85, %v89
    %v94 = vadd.f32 %v86, %v90
    %v95 = vadd.f32 %v87, %v91
    %v96 = vadd.f32 %v88, %v92
    %v97 = vpack.c.bf16 %v95, %v93
    %v98 = vpack.c.bf16 %v96, %v94
    %v99 = vld [vmem:[%s2] sm:$0xf]
    %v100 = vld [vmem:[%s2 + $0x4] sm:$0xf]
    %v101 = vld [vmem:[%s2 + $0x8] sm:$0xf]
    %v102 = vld [vmem:[%s2 + $0xc] sm:$0xf]
    %v103 = vld [vmem:[%s2 + $0x10] sm:$0xf]
    %v104 = vld [vmem:[%s2 + $0x14] sm:$0xf]
    %v105 = vld [vmem:[%s2 + $0x18] sm:$0xf]
    %v106 = vld [vmem:[%s2 + $0x1c] sm:$0xf]
    %v107 = vld [vmem:[%s2 + $0x20] sm:$0xf]
    %v108 = vld [vmem:[%s2 + $0x24] sm:$0xf]
    %v109 = vld [vmem:[%s2 + $0x28] sm:$0xf]
    %v110 = vld [vmem:[%s2 + $0x2c] sm:$0xf]
    %v111 = vld [vmem:[%s2 + $0x30] sm:$0xf]
    %v112 = vld [vmem:[%s2 + $0x34] sm:$0xf]
    %v113 = vld [vmem:[%s2 + $0x38] sm:$0xf]
    %v114 = vld [vmem:[%s2 + $0x3c] sm:$0xf]
    %v115 = vld [vmem:[%s2 + $0x40] sm:$0xf]
    %v116 = vld [vmem:[%s2 + $0x44] sm:$0xf]
    %v117 = vld [vmem:[%s2 + $0x48] sm:$0xf]
    %v118 = vld [vmem:[%s2 + $0x4c] sm:$0xf]
    %v119 = vld [vmem:[%s2 + $0x50] sm:$0xf]
    %v120 = vld [vmem:[%s2 + $0x54] sm:$0xf]
    %v121 = vld [vmem:[%s2 + $0x58] sm:$0xf]
    %v122 = vld [vmem:[%s2 + $0x5c] sm:$0xf]
    %v123 = vld [vmem:[%s2 + $0x60] sm:$0xf]
    %v124 = vld [vmem:[%s2 + $0x64] sm:$0xf]
    %v125 = vld [vmem:[%s2 + $0x68] sm:$0xf]
    %v126 = vld [vmem:[%s2 + $0x6c] sm:$0xf]
    %v127 = vld [vmem:[%s2 + $0x70] sm:$0xf]
    %v128 = vld [vmem:[%s2 + $0x74] sm:$0xf]
    %v129 = vld [vmem:[%s2 + $0x78] sm:$0xf]
    %v130 = vld [vmem:[%s2 + $0x7c] sm:$0xf]
    %v131 = vld [vmem:[%s4] sm:$0xf]
    %v132 = vld [vmem:[%s4 + $0x4] sm:$0xf]
    %v133 = vld [vmem:[%s4 + $0x8] sm:$0xf]
    %v134 = vld [vmem:[%s4 + $0xc] sm:$0xf]
    %v135 = vld [vmem:[%s4 + $0x10] sm:$0xf]
    %v136 = vld [vmem:[%s4 + $0x14] sm:$0xf]
    %v137 = vld [vmem:[%s4 + $0x18] sm:$0xf]
    %v138 = vld [vmem:[%s4 + $0x1c] sm:$0xf]
    %v139 = vld [vmem:[%s4 + $0x20] sm:$0xf]
    %v140 = vld [vmem:[%s4 + $0x24] sm:$0xf]
    %v141 = vld [vmem:[%s4 + $0x28] sm:$0xf]
    %v142 = vld [vmem:[%s4 + $0x2c] sm:$0xf]
    %v143 = vld [vmem:[%s4 + $0x30] sm:$0xf]
    %v144 = vld [vmem:[%s4 + $0x34] sm:$0xf]
    %v145 = vld [vmem:[%s4 + $0x38] sm:$0xf]
    %v146 = vld [vmem:[%s4 + $0x3c] sm:$0xf]
    %v147 = vld [vmem:[%s4 + $0x40] sm:$0xf]
    %v148 = vld [vmem:[%s4 + $0x44] sm:$0xf]
    %v149 = vld [vmem:[%s4 + $0x48] sm:$0xf]
    %v150 = vld [vmem:[%s4 + $0x4c] sm:$0xf]
    %v151 = vld [vmem:[%s4 + $0x50] sm:$0xf]
    %v152 = vld [vmem:[%s4 + $0x54] sm:$0xf]
    %v153 = vld [vmem:[%s4 + $0x58] sm:$0xf]
    %v154 = vld [vmem:[%s4 + $0x5c] sm:$0xf]
    %v155 = vld [vmem:[%s4 + $0x60] sm:$0xf]
    %v156 = vld [vmem:[%s4 + $0x64] sm:$0xf]
    %v157 = vld [vmem:[%s4 + $0x68] sm:$0xf]
    %v158 = vld [vmem:[%s4 + $0x6c] sm:$0xf]
    %v159 = vld [vmem:[%s4 + $0x70] sm:$0xf]
    %v160 = vld [vmem:[%s4 + $0x74] sm:$0xf]
    %v161 = vld [vmem:[%s4 + $0x78] sm:$0xf]
    %v162 = vld [vmem:[%s4 + $0x7c] sm:$0xf]
    %v195 = vunpack.c.l.b16 %v131
    %v196 = vunpack.c.l.b16 %v132
    %v197 = vunpack.c.l.b16 %v133
    %v198 = vunpack.c.l.b16 %v134
    %v199 = vunpack.c.l.b16 %v135
    %v200 = vunpack.c.l.b16 %v136
    %v201 = vunpack.c.l.b16 %v137
    %v202 = vunpack.c.l.b16 %v138
    %v203 = vunpack.c.l.b16 %v139
    %v204 = vunpack.c.l.b16 %v140
    %v205 = vunpack.c.l.b16 %v141
    %v206 = vunpack.c.l.b16 %v142
    %v207 = vunpack.c.l.b16 %v143
    %v208 = vunpack.c.l.b16 %v144
    %v209 = vunpack.c.l.b16 %v145
    %v210 = vunpack.c.l.b16 %v146
    %v211 = vunpack.c.l.b16 %v147
    %v212 = vunpack.c.l.b16 %v148
    %v213 = vunpack.c.l.b16 %v149
    %v214 = vunpack.c.l.b16 %v150
    %v215 = vunpack.c.l.b16 %v151
    %v216 = vunpack.c.l.b16 %v152
    %v217 = vunpack.c.l.b16 %v153
    %v218 = vunpack.c.l.b16 %v154
    %v219 = vunpack.c.l.b16 %v155
    %v220 = vunpack.c.l.b16 %v156
    %v221 = vunpack.c.l.b16 %v157
    %v222 = vunpack.c.l.b16 %v158
    %v223 = vunpack.c.l.b16 %v159
    %v224 = vunpack.c.l.b16 %v160
    %v225 = vunpack.c.l.b16 %v161
    %v226 = vunpack.c.l.b16 %v162
    %v227 = vpack.c.b16 %v196, %v195
    %v228 = vpack.c.b16 %v198, %v197
    %v229 = vpack.c.b16 %v200, %v199
    %v230 = vpack.c.b16 %v202, %v201
    %v231 = vpack.c.b16 %v204, %v203
    %v232 = vpack.c.b16 %v206, %v205
    %v233 = vpack.c.b16 %v208, %v207
    %v234 = vpack.c.b16 %v210, %v209
    %v235 = vpack.c.b16 %v212, %v211
    %v236 = vpack.c.b16 %v214, %v213
    %v237 = vpack.c.b16 %v216, %v215
    %v238 = vpack.c.b16 %v218, %v217
    %v239 = vpack.c.b16 %v220, %v219
    %v240 = vpack.c.b16 %v222, %v221
    %v241 = vpack.c.b16 %v224, %v223
    %v242 = vpack.c.b16 %v226, %v225
    %259 = vmatprep.subr.bf16.mxu0 0
    %260 = vmatpush1.bf16.msra.mxu0 %v234
    %261 = vmatprep.subr.bf16.mxu0 0
    %262 = vmatpush1.bf16.msra.mxu0 %v233
    %263 = vmatprep.subr.bf16.mxu0 0
    %264 = vmatpush1.bf16.msra.mxu0 %v232
    %265 = vmatprep.subr.bf16.mxu0 0
    %266 = vmatpush1.bf16.msra.mxu0 %v231
    %267 = vmatprep.subr.bf16.mxu0 0
    %268 = vmatpush1.bf16.msra.mxu0 %v230
    %269 = vmatprep.subr.bf16.mxu0 0
    %270 = vmatpush1.bf16.msra.mxu0 %v229
    %271 = vmatprep.subr.bf16.mxu0 0
    %272 = vmatpush1.bf16.msra.mxu0 %v228
    %273 = vmatprep.subr.bf16.mxu0 0
    %274 = vmatpush1.bf16.msra.mxu0 %v227
    %275 = vmatprep.subr.bf16.mxu0 0
    %276 = vmatpush2.bf16.msra.mxu0 %v242
    %277 = vmatprep.subr.bf16.mxu0 0
    %278 = vmatpush2.bf16.msra.mxu0 %v241
    %279 = vmatprep.subr.bf16.mxu0 0
    %280 = vmatpush2.bf16.msra.mxu0 %v240
    %281 = vmatprep.subr.bf16.mxu0 0
    %282 = vmatpush2.bf16.msra.mxu0 %v239
    %283 = vmatprep.subr.bf16.mxu0 0
    %284 = vmatpush2.bf16.msra.mxu0 %v238
    %285 = vmatprep.subr.bf16.mxu0 0
    %286 = vmatpush2.bf16.msra.mxu0 %v237
    %287 = vmatprep.subr.bf16.mxu0 0
    %288 = vmatpush2.bf16.msra.mxu0 %v236
    %289 = vmatprep.subr.bf16.mxu0 0
    %290 = vmatpush2.bf16.msra.mxu0 %v235
    %291 = vmatprep.mubr.bf16.mxu0 %v98
    %292 = vmatmul.mubr.bf16.gmra.mxu0 %v97
    %v293 = vpop.f32.mrf.mxu0
    %v294 = vadd.f32 0.0, %v293
    %v295 = vpop.f32.mrf.mxu0
    %v296 = vpop.f32.mrf.mxu0
    %v297 = vadd.f32 0.0, %v296
    %v298 = vpop.f32.mrf.mxu0
    %299 = vdwg.mxu0
    %v300 = vld [vmem:[%s9] sm:$0xff]
    %v301 = vld [vmem:[#allocation7] sm:$0xf]
    %v302 = vpack.c.bf16 %v297, %v294
    %304 = vset.pattern.permute.xlu0 0
    %305 = vperm.xlu0 %304, %v300
    %v306 = vpop.permute.xlu0 %305
    %vm308 = vcmask 130048
    %v310 = vsel %vm308, %v301, 0
    %312 = vmatprep.subr.bf16.mxu0 0
    %313 = vmatpush1.bf16.msra.mxu0 0
    %314 = vmatprep.subr.bf16.mxu0 0
    %315 = vmatpush1.bf16.msra.mxu0 0
    %316 = vmatprep.subr.bf16.mxu0 0
    %317 = vmatpush1.bf16.msra.mxu0 0
    %318 = vmatprep.subr.bf16.mxu0 0
    %319 = vmatpush1.bf16.msra.mxu0 0
    %320 = vmatprep.subr.bf16.mxu0 0
    %321 = vmatpush1.bf16.msra.mxu0 0
    %322 = vmatprep.subr.bf16.mxu0 0
    %323 = vmatpush1.bf16.msra.mxu0 0
    %324 = vmatprep.subr.bf16.mxu0 0
    %325 = vmatpush1.bf16.msra.mxu0 0
    %326 = vmatprep.subr.bf16.mxu0 0
    %327 = vmatpush1.bf16.msra.mxu0 %v302
    %328 = vmatprep.subr.bf16.mxu0 0
    %329 = vmatpush2.bf16.msra.mxu0 0
    %330 = vmatprep.subr.bf16.mxu0 0
    %331 = vmatpush2.bf16.msra.mxu0 0
    %332 = vmatprep.subr.bf16.mxu0 0
    %333 = vmatpush2.bf16.msra.mxu0 0
    %334 = vmatprep.subr.bf16.mxu0 0
    %335 = vmatpush2.bf16.msra.mxu0 0
    %336 = vmatprep.subr.bf16.mxu0 0
    %337 = vmatpush2.bf16.msra.mxu0 0
    %338 = vmatprep.subr.bf16.mxu0 0
    %339 = vmatpush2.bf16.msra.mxu0 0
    %340 = vmatprep.subr.bf16.mxu0 0
    %341 = vmatpush2.bf16.msra.mxu0 0
    %342 = vmatprep.subr.bf16.mxu0 0
    %343 = vmatpush2.bf16.msra.mxu0 0
    %344 = vmatprep.mubr.bf16.mxu0 0
    %345 = vmatmul.mubr.bf16.gmra.mxu0 %v310
    %v346 = vpop.f32.mrf.mxu0
    %v347 = vadd.f32 %v306, %v346
    %v348 = vpop.f32.mrf.mxu0
    %v349 = vpop.f32.mrf.mxu0
    %v350 = vpop.f32.mrf.mxu0
    %351 = vdwg.mxu0
    %v352 = vld [vmem:[%s8] sm:$0xff]
    %vm353 = vcmask 64512
    %v355 = vsel %vm353, %v352, 0
    %357 = vmatprep.subr.mxu0 0.0
    %358 = vmatpush1.msra.mxu0 0.0
    %359 = vmatprep.subr.mxu0 0.0
    %360 = vmatpush1.msra.mxu0 0.0
    %361 = vmatprep.subr.mxu0 0.0
    %362 = vmatpush1.msra.mxu0 0.0
    %363 = vmatprep.subr.mxu0 0.0
    %364 = vmatpush1.msra.mxu0 0.0
    %365 = vmatprep.subr.mxu0 0.0
    %366 = vmatpush1.msra.mxu0 0.0
    %367 = vmatprep.subr.mxu0 0.0
    %368 = vmatpush1.msra.mxu0 0.0
    %369 = vmatprep.subr.mxu0 0.0
    %370 = vmatpush1.msra.mxu0 0.0
    %371 = vmatprep.subr.mxu0 0.0
    %372 = vmatpush1.msra.mxu0 0.0
    %373 = vmatprep.subr.mxu0 0.0
    %374 = vmatpush1.msra.mxu0 0.0
    %375 = vmatprep.subr.mxu0 0.0
    %376 = vmatpush1.msra.mxu0 0.0
    %377 = vmatprep.subr.mxu0 0.0
    %378 = vmatpush1.msra.mxu0 0.0
    %379 = vmatprep.subr.mxu0 0.0
    %380 = vmatpush1.msra.mxu0 0.0
    %381 = vmatprep.subr.mxu0 0.0
    %382 = vmatpush1.msra.mxu0 0.0
    %383 = vmatprep.subr.mxu0 0.0
    %384 = vmatpush1.msra.mxu0 0.0
    %385 = vmatprep.subr.mxu0 0.0
    %386 = vmatpush1.msra.mxu0 0.0
    %387 = vmatprep.subr.mxu0 0.0
    %388 = vmatpush1.msra.mxu0 %v347
    %389 = vmatprep.subr.mxu0 0.0
    %390 = vmatpush2.msra.mxu0 0.0
    %391 = vmatprep.subr.mxu0 0.0
    %392 = vmatpush2.msra.mxu0 0.0
    %393 = vmatprep.subr.mxu0 0.0
    %394 = vmatpush2.msra.mxu0 0.0
    %395 = vmatprep.subr.mxu0 0.0
    %396 = vmatpush2.msra.mxu0 0.0
    %397 = vmatprep.subr.mxu0 0.0
    %398 = vmatpush2.msra.mxu0 0.0
    %399 = vmatprep.subr.mxu0 0.0
    %400 = vmatpush2.msra.mxu0 0.0
    %401 = vmatprep.subr.mxu0 0.0
    %402 = vmatpush2.msra.mxu0 0.0
    %403 = vmatprep.subr.mxu0 0.0
    %404 = vmatpush2.msra.mxu0 0.0
    %405 = vmatprep.subr.mxu0 0.0
    %406 = vmatpush2.msra.mxu0 0.0
    %407 = vmatprep.subr.mxu0 0.0
    %408 = vmatpush2.msra.mxu0 0.0
    %409 = vmatprep.subr.mxu0 0.0
    %410 = vmatpush2.msra.mxu0 0.0
    %411 = vmatprep.subr.mxu0 0.0
    %412 = vmatpush2.msra.mxu0 0.0
    %413 = vmatprep.subr.mxu0 0.0
    %414 = vmatpush2.msra.mxu0 0.0
    %415 = vmatprep.subr.mxu0 0.0
    %416 = vmatpush2.msra.mxu0 0.0
    %417 = vmatprep.subr.mxu0 0.0
    %418 = vmatpush2.msra.mxu0 0.0
    %419 = vmatprep.subr.mxu0 0.0
    %420 = vmatpush2.msra.mxu0 0.0
    %421 = vmatprep.mubr.f32.mxu0 0.0
    %422 = vmatmul.mubr.f32.gmra.mxu0 %v355
    %v423 = vpop.f32.mrf.mxu0
    %v424 = vadd.f32 0.0, %v423
    %v425 = vpop.f32.mrf.mxu0
    %426 = vdwg.mxu0
    %v427 = vsub.f32 %v347, %v424
    %v428 = vmul.f32 %v427, %v427
    %429 = vmatprep.subr.mxu0 0.0
    %430 = vmatpush1.msra.mxu0 0.0
    %431 = vmatprep.subr.mxu0 0.0
    %432 = vmatpush1.msra.mxu0 0.0
    %433 = vmatprep.subr.mxu0 0.0
    %434 = vmatpush1.msra.mxu0 0.0
    %435 = vmatprep.subr.mxu0 0.0
    %436 = vmatpush1.msra.mxu0 0.0
    %437 = vmatprep.subr.mxu0 0.0
    %438 = vmatpush1.msra.mxu0 0.0
    %439 = vmatprep.subr.mxu0 0.0
    %440 = vmatpush1.msra.mxu0 0.0
    %441 = vmatprep.subr.mxu0 0.0
    %442 = vmatpush1.msra.mxu0 0.0
    %443 = vmatprep.subr.mxu0 0.0
    %444 = vmatpush1.msra.mxu0 0.0
    %445 = vmatprep.subr.mxu0 0.0
    %446 = vmatpush1.msra.mxu0 0.0
    %447 = vmatprep.subr.mxu0 0.0
    %448 = vmatpush1.msra.mxu0 0.0
    %449 = vmatprep.subr.mxu0 0.0
    %450 = vmatpush1.msra.mxu0 0.0
    %451 = vmatprep.subr.mxu0 0.0
    %452 = vmatpush1.msra.mxu0 0.0
    %453 = vmatprep.subr.mxu0 0.0
    %454 = vmatpush1.msra.mxu0 0.0
    %455 = vmatprep.subr.mxu0 0.0
    %456 = vmatpush1.msra.mxu0 0.0
    %457 = vmatprep.subr.mxu0 0.0
    %458 = vmatpush1.msra.mxu0 0.0
    %459 = vmatprep.subr.mxu0 0.0
    %460 = vmatpush1.msra.mxu0 %v428
    %461 = vmatprep.subr.mxu0 0.0
    %462 = vmatpush2.msra.mxu0 0.0
    %463 = vmatprep.subr.mxu0 0.0
    %464 = vmatpush2.msra.mxu0 0.0
    %465 = vmatprep.subr.mxu0 0.0
    %466 = vmatpush2.msra.mxu0 0.0
    %467 = vmatprep.subr.mxu0 0.0
    %468 = vmatpush2.msra.mxu0 0.0
    %469 = vmatprep.subr.mxu0 0.0
    %470 = vmatpush2.msra.mxu0 0.0
    %471 = vmatprep.subr.mxu0 0.0
    %472 = vmatpush2.msra.mxu0 0.0
    %473 = vmatprep.subr.mxu0 0.0
    %474 = vmatpush2.msra.mxu0 0.0
    %475 = vmatprep.subr.mxu0 0.0
    %476 = vmatpush2.msra.mxu0 0.0
    %477 = vmatprep.subr.mxu0 0.0
    %478 = vmatpush2.msra.mxu0 0.0
    %479 = vmatprep.subr.mxu0 0.0
    %480 = vmatpush2.msra.mxu0 0.0
    %481 = vmatprep.subr.mxu0 0.0
    %482 = vmatpush2.msra.mxu0 0.0
    %483 = vmatprep.subr.mxu0 0.0
    %484 = vmatpush2.msra.mxu0 0.0
    %485 = vmatprep.subr.mxu0 0.0
    %486 = vmatpush2.msra.mxu0 0.0
    %487 = vmatprep.subr.mxu0 0.0
    %488 = vmatpush2.msra.mxu0 0.0
    %489 = vmatprep.subr.mxu0 0.0
    %490 = vmatpush2.msra.mxu0 0.0
    %491 = vmatprep.subr.mxu0 0.0
    %492 = vmatpush2.msra.mxu0 0.0
    %493 = vmatprep.mubr.f32.mxu0 0.0
    %494 = vmatmul.mubr.f32.gmra.mxu0 %v355
    %v495 = vpop.f32.mrf.mxu0
    %v496 = vadd.f32 1e-05, %v495
    %v497 = vpop.f32.mrf.mxu0
    %498 = vdwg.mxu0
    %v499 = vrsqrt.pop %v496
    %v500 = vmul.f32 %v427, %v499
    %501 = vset.pattern.permute.xlu0 1
    %502 = vperm.xlu0 %501, %v300
    %v503 = vpop.permute.xlu0 %502
    %v505 = vmul.f32 %v500, %v503
    %506 = vset.pattern.permute.xlu0 2
    %507 = vperm.xlu0 %506, %v300
    %v508 = vpop.permute.xlu0 %507
    %v510 = vadd.f32 %v505, %v508
    %vm511 = vcmp.ge.f32.partialorder %v510, 0.0
    %512 = vset.pattern.permute.xlu0 3
    %513 = vperm.xlu0 %512, %v300
    %v514 = vpop.permute.xlu0 %513
    %v516 = vmul.f32 %v514, %v510
    %v517 = vsel %vm511, %v510, %v516
    %v518 = vld [vmem:[%s7] sm:$0xf]
    %v519 = vld [vmem:[%s7 + $0x4] sm:$0xf]
    %v520 = vpack.c.bf16 %v517, %v517
    %v521 = vld [vmem:[%s10] sm:$0xff]
    %v522 = vld [vmem:[%s10 + $0x8] sm:$0xff]
    %524 = vset.pattern.permute.xlu0 2
    %525 = vperm.xlu0 %524, %v521
    %v526 = vpop.permute.xlu0 %525
    %529 = vset.pattern.permute.xlu0 2
    %530 = vperm.xlu0 %529, %v522
    %v531 = vpop.permute.xlu0 %530
    %v535 = vunpack.c.l.b16 %v518
    %v536 = vunpack.c.l.b16 %v519
    %v537 = vpack.c.b16 %v536, %v535
    %v539 = vsel %vm353, %v537, 0
    %vm541 = vcmask 1043456
    %v543 = vsel %vm541, %v520, 0
    %545 = vmatprep.subr.bf16.mxu0 0
    %546 = vmatpush1.bf16.msra.mxu0 0
    %547 = vmatprep.subr.bf16.mxu0 0
    %548 = vmatpush1.bf16.msra.mxu0 0
    %549 = vmatprep.subr.bf16.mxu0 0
    %550 = vmatpush1.bf16.msra.mxu0 0
    %551 = vmatprep.subr.bf16.mxu0 0
    %552 = vmatpush1.bf16.msra.mxu0 0
    %553 = vmatprep.subr.bf16.mxu0 0
    %554 = vmatpush1.bf16.msra.mxu0 0
    %555 = vmatprep.subr.bf16.mxu0 0
    %556 = vmatpush1.bf16.msra.mxu0 0
    %557 = vmatprep.subr.bf16.mxu0 0
    %558 = vmatpush1.bf16.msra.mxu0 0
    %559 = vmatprep.subr.bf16.mxu0 0
    %560 = vmatpush1.bf16.msra.mxu0 %v543
    %561 = vmatprep.subr.bf16.mxu0 0
    %562 = vmatpush2.bf16.msra.mxu0 0
    %563 = vmatprep.subr.bf16.mxu0 0
    %564 = vmatpush2.bf16.msra.mxu0 0
    %565 = vmatprep.subr.bf16.mxu0 0
    %566 = vmatpush2.bf16.msra.mxu0 0
    %567 = vmatprep.subr.bf16.mxu0 0
    %568 = vmatpush2.bf16.msra.mxu0 0
    %569 = vmatprep.subr.bf16.mxu0 0
    %570 = vmatpush2.bf16.msra.mxu0 0
    %571 = vmatprep.subr.bf16.mxu0 0
    %572 = vmatpush2.bf16.msra.mxu0 0
    %573 = vmatprep.subr.bf16.mxu0 0
    %574 = vmatpush2.bf16.msra.mxu0 0
    %575 = vmatprep.subr.bf16.mxu0 0
    %576 = vmatpush2.bf16.msra.mxu0 0
    %577 = vmatprep.mubr.bf16.mxu0 0
    %578 = vmatmul.mubr.bf16.gmra.mxu0 %v539
    %v579 = vpop.f32.mrf.mxu0
    %v580 = vadd.f32 %v526, %v579
    %v581 = vpop.f32.mrf.mxu0
    %v582 = vpop.f32.mrf.mxu0
    %v583 = vadd.f32 %v531, %v582
    %v584 = vpop.f32.mrf.mxu0
    %585 = vdwg.mxu0
    %v586 = vpack.c.bf16 %v583, %v580
    %v587 = vld [vmem:[%s5] sm:$0xff]
    %v588 = vld [vmem:[%s5 + $0x8] sm:$0xff]
    %v591 = vunpack.c.l.b16 %v587
    %v592 = vunpack.c.h.b16 %v587
    %v593 = vunpack.c.l.b16 %v588
    %v594 = vunpack.c.h.b16 %v588
    %v595 = vpack.c.b16 %v593, %v591
    %v596 = vpack.c.b16 %v594, %v592
    %v600 = vsel %vm308, %v586, 0
    %602 = vmatprep.subr.bf16.mxu0 0
    %603 = vmatpush1.bf16.msra.mxu0 0
    %604 = vmatprep.subr.bf16.mxu0 0
    %605 = vmatpush1.bf16.msra.mxu0 0
    %606 = vmatprep.subr.bf16.mxu0 0
    %607 = vmatpush1.bf16.msra.mxu0 0
    %608 = vmatprep.subr.bf16.mxu0 0
    %609 = vmatpush1.bf16.msra.mxu0 0
    %610 = vmatprep.subr.bf16.mxu0 0
    %611 = vmatpush1.bf16.msra.mxu0 0
    %612 = vmatprep.subr.bf16.mxu0 0
    %613 = vmatpush1.bf16.msra.mxu0 0
    %614 = vmatprep.subr.bf16.mxu0 0
    %615 = vmatpush1.bf16.msra.mxu0 0
    %616 = vmatprep.subr.bf16.mxu0 %v596
    %617 = vmatpush1.bf16.msra.mxu0 %v595
    %618 = vmatprep.subr.bf16.mxu0 0
    %619 = vmatpush2.bf16.msra.mxu0 0
    %620 = vmatprep.subr.bf16.mxu0 0
    %621 = vmatpush2.bf16.msra.mxu0 0
    %622 = vmatprep.subr.bf16.mxu0 0
    %623 = vmatpush2.bf16.msra.mxu0 0
    %624 = vmatprep.subr.bf16.mxu0 0
    %625 = vmatpush2.bf16.msra.mxu0 0
    %626 = vmatprep.subr.bf16.mxu0 0
    %627 = vmatpush2.bf16.msra.mxu0 0
    %628 = vmatprep.subr.bf16.mxu0 0
    %629 = vmatpush2.bf16.msra.mxu0 0
    %630 = vmatprep.subr.bf16.mxu0 0
    %631 = vmatpush2.bf16.msra.mxu0 0
    %632 = vmatprep.subr.bf16.mxu0 0
    %633 = vmatpush2.bf16.msra.mxu0 0
    %634 = vmatprep.mubr.bf16.mxu0 0
    %635 = vmatmul.mubr.bf16.gmra.mxu0 %v600
    %v636 = vpop.f32.mrf.mxu0
    %v637 = vadd.f32 0.0, %v636
    %v638 = vpop.f32.mrf.mxu0
    %v639 = vadd.f32 0.0, %v638
    %v640 = vpop.f32.mrf.mxu0
    %v641 = vadd.f32 0.0, %v640
    %v642 = vpop.f32.mrf.mxu0
    %v643 = vadd.f32 0.0, %v642
    %644 = vdwg.mxu0
    %v645 = vld [vmem:[%s11] sm:$0x3]
    %v646 = vlaneseq
    %v647 = vshrl.u32 %v646, 7
    %v648 = vsub.s32 0, %v647
    %v649 = vrot.slane %v645, %v648
    %v682 = vunpack.c.l.b16 %v99
    %v683 = vunpack.c.l.b16 %v100
    %v684 = vunpack.c.l.b16 %v101
    %v685 = vunpack.c.l.b16 %v102
    %v686 = vunpack.c.l.b16 %v103
    %v687 = vunpack.c.l.b16 %v104
    %v688 = vunpack.c.l.b16 %v105
    %v689 = vunpack.c.l.b16 %v106
    %v690 = vunpack.c.l.b16 %v107
    %v691 = vunpack.c.l.b16 %v108
    %v692 = vunpack.c.l.b16 %v109
    %v693 = vunpack.c.l.b16 %v110
    %v694 = vunpack.c.l.b16 %v111
    %v695 = vunpack.c.l.b16 %v112
    %v696 = vunpack.c.l.b16 %v113
    %v697 = vunpack.c.l.b16 %v114
    %v698 = vunpack.c.l.b16 %v115
    %v699 = vunpack.c.l.b16 %v116
    %v700 = vunpack.c.l.b16 %v117
    %v701 = vunpack.c.l.b16 %v118
    %v702 = vunpack.c.l.b16 %v119
    %v703 = vunpack.c.l.b16 %v120
    %v704 = vunpack.c.l.b16 %v121
    %v705 = vunpack.c.l.b16 %v122
    %v706 = vunpack.c.l.b16 %v123
    %v707 = vunpack.c.l.b16 %v124
    %v708 = vunpack.c.l.b16 %v125
    %v709 = vunpack.c.l.b16 %v126
    %v710 = vunpack.c.l.b16 %v127
    %v711 = vunpack.c.l.b16 %v128
    %v712 = vunpack.c.l.b16 %v129
    %v713 = vunpack.c.l.b16 %v130
    %v714 = vpack.c.b16 %v683, %v682
    %v715 = vpack.c.b16 %v685, %v684
    %v716 = vpack.c.b16 %v687, %v686
    %v717 = vpack.c.b16 %v689, %v688
    %v718 = vpack.c.b16 %v691, %v690
    %v719 = vpack.c.b16 %v693, %v692
    %v720 = vpack.c.b16 %v695, %v694
    %v721 = vpack.c.b16 %v697, %v696
    %v722 = vpack.c.b16 %v699, %v698
    %v723 = vpack.c.b16 %v701, %v700
    %v724 = vpack.c.b16 %v703, %v702
    %v725 = vpack.c.b16 %v705, %v704
    %v726 = vpack.c.b16 %v707, %v706
    %v727 = vpack.c.b16 %v709, %v708
    %v728 = vpack.c.b16 %v711, %v710
    %v729 = vpack.c.b16 %v713, %v712
    %746 = vmatprep.subr.bf16.mxu0 0
    %747 = vmatpush1.bf16.msra.mxu0 %v721
    %748 = vmatprep.subr.bf16.mxu0 0
    %749 = vmatpush1.bf16.msra.mxu0 %v720
    %750 = vmatprep.subr.bf16.mxu0 0
    %751 = vmatpush1.bf16.msra.mxu0 %v719
    %752 = vmatprep.subr.bf16.mxu0 0
    %753 = vmatpush1.bf16.msra.mxu0 %v718
    %754 = vmatprep.subr.bf16.mxu0 0
    %755 = vmatpush1.bf16.msra.mxu0 %v717
    %756 = vmatprep.subr.bf16.mxu0 0
    %757 = vmatpush1.bf16.msra.mxu0 %v716
    %758 = vmatprep.subr.bf16.mxu0 0
    %759 = vmatpush1.bf16.msra.mxu0 %v715
    %760 = vmatprep.subr.bf16.mxu0 0
    %761 = vmatpush1.bf16.msra.mxu0 %v714
    %762 = vmatprep.subr.bf16.mxu0 0
    %763 = vmatpush2.bf16.msra.mxu0 %v729
    %764 = vmatprep.subr.bf16.mxu0 0
    %765 = vmatpush2.bf16.msra.mxu0 %v728
    %766 = vmatprep.subr.bf16.mxu0 0
    %767 = vmatpush2.bf16.msra.mxu0 %v727
    %768 = vmatprep.subr.bf16.mxu0 0
    %769 = vmatpush2.bf16.msra.mxu0 %v726
    %770 = vmatprep.subr.bf16.mxu0 0
    %771 = vmatpush2.bf16.msra.mxu0 %v725
    %772 = vmatprep.subr.bf16.mxu0 0
    %773 = vmatpush2.bf16.msra.mxu0 %v724
    %774 = vmatprep.subr.bf16.mxu0 0
    %775 = vmatpush2.bf16.msra.mxu0 %v723
    %776 = vmatprep.subr.bf16.mxu0 0
    %777 = vmatpush2.bf16.msra.mxu0 %v722
    %778 = vmatprep.mubr.bf16.mxu0 %v98
    %779 = vmatmul.mubr.bf16.gmra.mxu0 %v97
    %v780 = vpop.f32.mrf.mxu0
    %v781 = vadd.f32 %v649, %v780
    %v782 = vpop.f32.mrf.mxu0
    %v783 = vpop.f32.mrf.mxu0
    %v784 = vadd.f32 %v649, %v783
    %v785 = vpop.f32.mrf.mxu0
    %786 = vdwg.mxu0
    %v787 = vrot.slane %v781, 4
    %v788 = vadd.f32 %v781, %v787
    %v789 = vrot.slane %v788, 2
    %v790 = vadd.f32 %v788, %v789
    %v791 = vrot.slane %v790, 1
    %v792 = vadd.f32 %v790, %v791
    %v793 = vrot.slane %v784, 4
    %v794 = vadd.f32 %v784, %v793
    %v795 = vrot.slane %v794, 2
    %v796 = vadd.f32 %v794, %v795
    %v797 = vrot.slane %v796, 1
    %v798 = vadd.f32 %v796, %v797
    %v799 = vrcp.pop 8.0
    %v800 = vmul.f32 %v792, %v799
    %v801 = vmul.f32 %v798, %v799
    %v802 = vsub.f32 %v781, %v800
    %v803 = vsub.f32 %v784, %v801
    %v804 = vmul.f32 %v802, %v802
    %v805 = vmul.f32 %v803, %v803
    %v806 = vrot.slane %v804, 4
    %v807 = vadd.f32 %v804, %v806
    %v808 = vrot.slane %v807, 2
    %v809 = vadd.f32 %v807, %v808
    %v810 = vrot.slane %v809, 1
    %v811 = vadd.f32 %v809, %v810
    %v812 = vrot.slane %v805, 4
    %v813 = vadd.f32 %v805, %v812
    %v814 = vrot.slane %v813, 2
    %v815 = vadd.f32 %v813, %v814
    %v816 = vrot.slane %v815, 1
    %v817 = vadd.f32 %v815, %v816
    %v818 = vmul.f32 %v811, %v799
    %v819 = vmul.f32 %v817, %v799
    %v820 = vadd.f32 %v818, 1e-05
    %v821 = vadd.f32 %v819, 1e-05
    %v822 = vrsqrt.pop %v820
    %v823 = vrsqrt.pop %v821
    %v824 = vmul.f32 %v802, %v822
    %v825 = vmul.f32 %v803, %v823
    %826 = vset.pattern.permute.xlu0 0
    %827 = vperm.xlu0 %826, %v521
    %v828 = vpop.permute.xlu0 %827
    %830 = vset.pattern.permute.xlu0 0
    %831 = vperm.xlu0 %830, %v522
    %v832 = vpop.permute.xlu0 %831
    %v834 = vmul.f32 %v824, %v828
    %v835 = vmul.f32 %v825, %v832
    %836 = vset.pattern.permute.xlu0 1
    %837 = vperm.xlu0 %836, %v521
    %v838 = vpop.permute.xlu0 %837
    %840 = vset.pattern.permute.xlu0 1
    %841 = vperm.xlu0 %840, %v522
    %v842 = vpop.permute.xlu0 %841
    %v844 = vadd.f32 %v834, %v838
    %v845 = vadd.f32 %v835, %v842
    %vm846 = vcmp.ge.f32.partialorder %v844, 0.0
    %vm847 = vcmp.ge.f32.partialorder %v845, 0.0
    %v848 = vlaneseq
    %v849 = vshrl.u32 %v848, 7
    %v850 = vsub.s32 1, %v849
    %v851 = vrot.slane %v645, %v850
    %v852 = vmul.f32 %v851, %v844
    %v853 = vmul.f32 %v851, %v845
    %v854 = vsel %vm846, %v844, %v852
    %v855 = vsel %vm847, %v845, %v853
    %v856 = vpack.c.bf16 %v855, %v854
    %v857 = vld [vmem:[#allocation5] sm:$0xff]
    %v858 = vld [vmem:[#allocation5 + $0x8] sm:$0xff]
    %v859 = vld [vmem:[#allocation5 + $0x10] sm:$0xff]
    %v860 = vld [vmem:[#allocation5 + $0x18] sm:$0xff]
    %v861 = vld [vmem:[#allocation5 + $0x20] sm:$0xff]
    %v862 = vld [vmem:[#allocation5 + $0x28] sm:$0xff]
    %v863 = vld [vmem:[#allocation5 + $0x30] sm:$0xff]
    %v864 = vld [vmem:[#allocation5 + $0x38] sm:$0xff]
    %v865 = vld [vmem:[#allocation5 + $0x40] sm:$0xff]
    %v866 = vld [vmem:[#allocation5 + $0x48] sm:$0xff]
    %v867 = vld [vmem:[#allocation5 + $0x50] sm:$0xff]
    %v868 = vld [vmem:[#allocation5 + $0x58] sm:$0xff]
    %v869 = vld [vmem:[#allocation5 + $0x60] sm:$0xff]
    %v870 = vld [vmem:[#allocation5 + $0x68] sm:$0xff]
    %v871 = vld [vmem:[#allocation5 + $0x70] sm:$0xff]
    %v872 = vld [vmem:[#allocation5 + $0x78] sm:$0xff]
    %v873 = vld [vmem:[%s12] sm:$0x3]
    %v875 = vlaneseq
    %v876 = vshrl.u32 %v875, 7
    %v877 = vsub.s32 0, %v876
    %v878 = vrot.slane %v873, %v877
    %v879 = vlaneseq
    %v880 = vshrl.u32 %v879, 7
    %v881 = vsub.s32 1, %v880
    %v882 = vrot.slane %v873, %v881
    %v901 = vunpack.c.l.b16 %v857
    %v902 = vunpack.c.h.b16 %v857
    %v903 = vunpack.c.l.b16 %v858
    %v904 = vunpack.c.h.b16 %v858
    %v905 = vunpack.c.l.b16 %v859
    %v906 = vunpack.c.h.b16 %v859
    %v907 = vunpack.c.l.b16 %v860
    %v908 = vunpack.c.h.b16 %v860
    %v909 = vunpack.c.l.b16 %v861
    %v910 = vunpack.c.h.b16 %v861
    %v911 = vunpack.c.l.b16 %v862
    %v912 = vunpack.c.h.b16 %v862
    %v913 = vunpack.c.l.b16 %v863
    %v914 = vunpack.c.h.b16 %v863
    %v915 = vunpack.c.l.b16 %v864
    %v916 = vunpack.c.h.b16 %v864
    %v917 = vunpack.c.l.b16 %v865
    %v918 = vunpack.c.h.b16 %v865
    %v919 = vunpack.c.l.b16 %v866
    %v920 = vunpack.c.h.b16 %v866
    %v921 = vunpack.c.l.b16 %v867
    %v922 = vunpack.c.h.b16 %v867
    %v923 = vunpack.c.l.b16 %v868
    %v924 = vunpack.c.h.b16 %v868
    %v925 = vunpack.c.l.b16 %v869
    %v926 = vunpack.c.h.b16 %v869
    %v927 = vunpack.c.l.b16 %v870
    %v928 = vunpack.c.h.b16 %v870
    %v929 = vunpack.c.l.b16 %v871
    %v930 = vunpack.c.h.b16 %v871
    %v931 = vunpack.c.l.b16 %v872
    %v932 = vunpack.c.h.b16 %v872
    %v933 = vpack.c.b16 %v903, %v901
    %v934 = vpack.c.b16 %v904, %v902
    %v935 = vpack.c.b16 %v907, %v905
    %v936 = vpack.c.b16 %v908, %v906
    %v937 = vpack.c.b16 %v911, %v909
    %v938 = vpack.c.b16 %v912, %v910
    %v939 = vpack.c.b16 %v915, %v913
    %v940 = vpack.c.b16 %v916, %v914
    %v941 = vpack.c.b16 %v919, %v917
    %v942 = vpack.c.b16 %v920, %v918
    %v943 = vpack.c.b16 %v923, %v921
    %v944 = vpack.c.b16 %v924, %v922
    %v945 = vpack.c.b16 %v927, %v925
    %v946 = vpack.c.b16 %v928, %v926
    %v947 = vpack.c.b16 %v931, %v929
    %v948 = vpack.c.b16 %v932, %v930
    %965 = vmatprep.subr.bf16.mxu0 %v948
    %966 = vmatpush1.bf16.msra.mxu0 %v947
    %967 = vmatprep.subr.bf16.mxu0 %v946
    %968 = vmatpush1.bf16.msra.mxu0 %v945
    %969 = vmatprep.subr.bf16.mxu0 %v944
    %970 = vmatpush1.bf16.msra.mxu0 %v943
    %971 = vmatprep.subr.bf16.mxu0 %v942
    %972 = vmatpush1.bf16.msra.mxu0 %v941
    %973 = vmatprep.subr.bf16.mxu0 %v940
    %974 = vmatpush1.bf16.msra.mxu0 %v939
    %975 = vmatprep.subr.bf16.mxu0 %v938
    %976 = vmatpush1.bf16.msra.mxu0 %v937
    %977 = vmatprep.subr.bf16.mxu0 %v936
    %978 = vmatpush1.bf16.msra.mxu0 %v935
    %979 = vmatprep.subr.bf16.mxu0 %v934
    %980 = vmatpush1.bf16.msra.mxu0 %v933
    %981 = vmatprep.subr.bf16.mxu0 0
    %982 = vmatpush2.bf16.msra.mxu0 0
    %983 = vmatprep.subr.bf16.mxu0 0
    %984 = vmatpush2.bf16.msra.mxu0 0
    %985 = vmatprep.subr.bf16.mxu0 0
    %986 = vmatpush2.bf16.msra.mxu0 0
    %987 = vmatprep.subr.bf16.mxu0 0
    %988 = vmatpush2.bf16.msra.mxu0 0
    %989 = vmatprep.subr.bf16.mxu0 0
    %990 = vmatpush2.bf16.msra.mxu0 0
    %991 = vmatprep.subr.bf16.mxu0 0
    %992 = vmatpush2.bf16.msra.mxu0 0
    %993 = vmatprep.subr.bf16.mxu0 0
    %994 = vmatpush2.bf16.msra.mxu0 0
    %995 = vmatprep.subr.bf16.mxu0 0
    %996 = vmatpush2.bf16.msra.mxu0 0
    %997 = vmatprep.mubr.bf16.mxu0 0
    %998 = vmatmul.mubr.bf16.gmra.mxu0 %v856
    %v999 = vpop.f32.mrf.mxu0
    %v1000 = vadd.f32 %v878, %v999
    %v1001 = vpop.f32.mrf.mxu0
    %v1002 = vadd.f32 %v882, %v1001
    %v1003 = vpop.f32.mrf.mxu0
    %v1004 = vadd.f32 %v878, %v1003
    %v1005 = vpop.f32.mrf.mxu0
    %v1006 = vadd.f32 %v882, %v1005
    %1007 = vdwg.mxu0
    %v1008 = vadd.f32 %v1000, %v637
    %v1009 = vadd.f32 %v1002, %v639
    %v1010 = vadd.f32 %v1004, %v641
    %v1011 = vadd.f32 %v1006, %v643
    %v1012 = vxor.u32 %v1008, 2147483648
    %v1013 = vxor.u32 %v1009, 2147483648
    %v1014 = vxor.u32 %v1010, 2147483648
    %v1015 = vxor.u32 %v1011, 2147483648
    %v1016 = vmul.f32 %v1012, 1.442695
    %v1017 = vpow.pop %v1016
    %v1018 = vmul.f32 %v1013, 1.442695
    %v1019 = vpow.pop %v1018
    %v1020 = vmul.f32 %v1014, 1.442695
    %v1021 = vpow.pop %v1020
    %v1022 = vmul.f32 %v1015, 1.442695
    %v1023 = vpow.pop %v1022
    %v1024 = vadd.f32 %v1017, 1.0
    %v1025 = vadd.f32 %v1019, 1.0
    %v1026 = vadd.f32 %v1021, 1.0
    %v1027 = vadd.f32 %v1023, 1.0
    %v1028 = vrcp.pop %v1024
    %v1029 = vmul.f32 1.0, %v1028
    %v1030 = vrcp.pop %v1025
    %v1031 = vmul.f32 1.0, %v1030
    %v1032 = vrcp.pop %v1026
    %v1033 = vmul.f32 1.0, %v1032
    %v1034 = vrcp.pop %v1027
    %v1035 = vmul.f32 1.0, %v1034
    %v1036 = vsub.f32 %v85, %v89
    %v1037 = vsub.f32 %v86, %v90
    %v1038 = vsub.f32 %v87, %v91
    %v1039 = vsub.f32 %v88, %v92
    %v1040 = vmul.f32 %v1029, %v1036
    %v1041 = vmul.f32 %v1031, %v1037
    %v1042 = vmul.f32 %v1033, %v1038
    %v1043 = vmul.f32 %v1035, %v1039
    %v1044 = vadd.f32 %v89, %v1040
    %v1045 = vadd.f32 %v90, %v1041
    %v1046 = vadd.f32 %v91, %v1042
    %v1047 = vadd.f32 %v92, %v1043
    %1048 = vst [vmem:[#allocation8] sm:$0xff] %v1044
    %1049 = vst [vmem:[#allocation8 + $0x8] sm:$0xff] %v1045
    %1050 = vst [vmem:[#allocation8 + $0x10] sm:$0xff] %v1046
    %1051 = vst [vmem:[#allocation8 + $0x18] sm:$0xff] %v1047
    // Predicated region
    $region66: #{tpu_custom_call.1} parent=1 // pred_check
      _
    $region67: #{tpu_custom_call.1} parent=1 // pred_check_branch
      %1053 = sbr.rel (0) target = $region69
    $region68: #{tpu_custom_call.1} parent=1 // pred_region
      %s1055 = ssub.s32 512, 512
      %1056 = vsyncadd [#allocation4], %s1055
      %s1057 = sshll.u32 [#allocation8], 4
      %s1058 = int_to_ptr.vmem [resolvable:$true] %s1057
      %1063 = dma.vmem_to_hbm [thread:$0]  %s1058, 512, %s13, [#allocation4], 256, 256, 16
    $region69: #{tpu_custom_call.1} parent=1 // pred_fallthru
      _
    // Predicated region
    $region70: #{tpu_custom_call.1} parent=1 // pred_check
      _
    $region71: #{tpu_custom_call.1} parent=1 // pred_check_branch
      %1065 = sbr.rel (0) target = $region73
    $region72: #{tpu_custom_call.1} parent=1 // pred_region
      %1066 = dma.done [#allocation4], 512
    $region73: #{tpu_custom_call.1} parent=1 // pred_fallthru
      _
    %1067 = vsyncpa [#allocation3], 1
    %1068 = vsyncpa [#allocation6], 1
    %1069 = vsyncpa [#allocation4], 1

</llo_original>
